<compile_context>
chip_gen: v7x
topology: tpu7x:2x2x1
jax: 0.10.0
libtpu: 0.0.40
codegen_flags: <defaults>
</compile_context>

<pallas_src>
import functools

import jax
import jax.numpy as jnp
from jax.experimental import pallas as pl
from jax.experimental.pallas import tpu as pltpu


# ----------------------------------------------------------------------------
# helpers
# ----------------------------------------------------------------------------
def _round_up(x, m):
    return (x + m - 1) // m * m


def _cdiv(a, b):
    return (a + b - 1) // b


def _choose_row_tile(rows, requested):
    # divisor-aware: split rows into cdiv(rows, requested) tiles, round each
    # tile up to a multiple of 16 (bf16 sublane packing) -> padding < 1 tile.
    n_tiles = max(1, _cdiv(rows, requested))
    return _round_up(_cdiv(rows, n_tiles), 16)


def _pad_rows(a, tile):
    rows = a.shape[0]
    rows_p = _round_up(rows, tile)
    if rows_p != rows:
        a = jnp.pad(a, ((0, rows_p - rows), (0, 0)))
    return a


# ----------------------------------------------------------------------------
# Linear: y = x @ W + b   (bf16 matmul, f32 accumulate, bf16 out)
# Used once per layer for the fused QKV projection (dout = 3*d_model).
# ----------------------------------------------------------------------------
def _linear_kernel(x_ref, w_ref, b_ref, o_ref):
    y = jnp.dot(x_ref[...], w_ref[...], preferred_element_type=jnp.float32)
    o_ref[...] = (y + b_ref[...]).astype(o_ref.dtype)


def linear(x2d, w, b, *, row_tile=256):
    rows, din = x2d.shape
    dout = w.shape[1]
    tile = _choose_row_tile(rows, row_tile)
    xp = _pad_rows(x2d, tile)
    rows_p = xp.shape[0]
    out = pl.pallas_call(
        _linear_kernel,
        out_shape=jax.ShapeDtypeStruct((rows_p, dout), x2d.dtype),
        grid=(rows_p // tile,),
        in_specs=[
            pl.BlockSpec((tile, din), lambda i: (i, 0)),
            pl.BlockSpec((din, dout), lambda i: (0, 0)),
            pl.BlockSpec((1, dout), lambda i: (0, 0)),
        ],
        out_specs=pl.BlockSpec((tile, dout), lambda i: (i, 0)),
        compiler_params=pltpu.CompilerParams(dimension_semantics=("parallel",)),
    )(xp, w, b.reshape(1, dout))
    return out[:rows]


# ----------------------------------------------------------------------------
# Attention core: all heads of one batch element per grid step.
# Input is the fused qkv block (1, S, 3*d_model); head split is a static lane
# slice inside the kernel; output is one lane-dense (S, d_model) slab.
# ----------------------------------------------------------------------------
def _attn_kernel(qkv_ref, o_ref, *, n_heads, d_model, scale):
    dh = d_model // n_heads
    qkv = qkv_ref[0]                                   # (S, 3*d_model) bf16
    outs = []
    for h in range(n_heads):                           # static unroll, traced once
        q_off = h * dh
        k_off = d_model + h * dh
        v_off = 2 * d_model + h * dh
        qh = qkv[:, q_off:q_off + dh] * scale          # fold scale into q (S, dh)
        kh = qkv[:, k_off:k_off + dh]
        vh = qkv[:, v_off:v_off + dh]
        s = jax.lax.dot_general(qh, kh, (((1,), (1,)), ((), ())),
                                preferred_element_type=jnp.float32)   # (S, S) f32
        s = s - jnp.max(s, axis=-1, keepdims=True)
        p = jnp.exp(s)
        l = jnp.sum(p, axis=-1, keepdims=True)         # (S, 1)
        o_h = jnp.dot(p.astype(vh.dtype), vh,
                      preferred_element_type=jnp.float32)
        # normalization deferred to the small (S, dh) output; approx recip -> EUP
        outs.append(o_h * pl.reciprocal(l, approx=True))
    o = jnp.concatenate(outs, axis=-1)                 # (S, d_model) head merge
    o_ref[0] = o.astype(o_ref.dtype)                   # lane-dense store


def attention_core(qkv, *, n_heads, scale):
    B, S, d3 = qkv.shape
    d_model = d3 // 3
    return pl.pallas_call(
        functools.partial(_attn_kernel, n_heads=n_heads, d_model=d_model,
                          scale=scale),
        out_shape=jax.ShapeDtypeStruct((B, S, d_model), qkv.dtype),
        grid=(B,),
        in_specs=[pl.BlockSpec((1, S, d3), lambda i: (i, 0, 0))],
        out_specs=pl.BlockSpec((1, S, d_model), lambda i: (i, 0, 0)),
        compiler_params=pltpu.CompilerParams(dimension_semantics=("parallel",)),
    )(qkv)


# ----------------------------------------------------------------------------
# Fused output projection + residual add + LayerNorm:
#   x1 = LN( (a @ Wo + bo) + resid )
# ----------------------------------------------------------------------------
def _proj_add_ln_kernel(a_ref, w_ref, b_ref, r_ref, g_ref, be_ref, o_ref, *, eps):
    y = jnp.dot(a_ref[...], w_ref[...], preferred_element_type=jnp.float32)
    z = y + b_ref[...] + r_ref[...].astype(jnp.float32)
    mu = jnp.mean(z, axis=-1, keepdims=True)
    zc = z - mu
    var = jnp.mean(zc * zc, axis=-1, keepdims=True)
    o_ref[...] = (zc * jax.lax.rsqrt(var + eps) * g_ref[...]
                  + be_ref[...]).astype(o_ref.dtype)


def proj_add_layernorm(a2d, w, b, resid2d, gamma, beta, *, row_tile=256, eps=1e-5):
    rows, d_model = a2d.shape
    tile = _choose_row_tile(rows, row_tile)
    ap = _pad_rows(a2d, tile)
    rp = _pad_rows(resid2d, tile)
    rows_p = ap.shape[0]
    out = pl.pallas_call(
        functools.partial(_proj_add_ln_kernel, eps=eps),
        out_shape=jax.ShapeDtypeStruct((rows_p, d_model), a2d.dtype),
        grid=(rows_p // tile,),
        in_specs=[
            pl.BlockSpec((tile, d_model), lambda i: (i, 0)),
            pl.BlockSpec((d_model, d_model), lambda i: (0, 0)),
            pl.BlockSpec((1, d_model), lambda i: (0, 0)),
            pl.BlockSpec((tile, d_model), lambda i: (i, 0)),
            pl.BlockSpec((1, d_model), lambda i: (0, 0)),
            pl.BlockSpec((1, d_model), lambda i: (0, 0)),
        ],
        out_specs=pl.BlockSpec((tile, d_model), lambda i: (i, 0)),
        compiler_params=pltpu.CompilerParams(dimension_semantics=("parallel",)),
    )(ap, w, b.reshape(1, d_model), rp,
      gamma.reshape(1, d_model), beta.reshape(1, d_model))
    return out[:rows]


# ----------------------------------------------------------------------------
# Fused FFN + residual add + LayerNorm with d_ff reduction grid axis:
#   x2 = LN( relu(x @ W1 + b1) @ W2 + b2 + x )
# x is both matmul input and residual -> already resident in VMEM.
# ----------------------------------------------------------------------------
def _ffn_add_ln_kernel(x_ref, w1_ref, b1_ref, w2_ref, b2_ref, g_ref, be_ref,
                       o_ref, acc_ref, *, eps):
    f = pl.program_id(1)

    @pl.when(f == 0)
    def _():
        acc_ref[...] = jnp.zeros_like(acc_ref)

    h = jnp.dot(x_ref[...], w1_ref[...], preferred_element_type=jnp.float32)
    h = jnp.maximum(h + b1_ref[...], 0.0)                  # bias + ReLU in f32
    # TODO(synk): dropout omitted (eval-mode identity).
    acc_ref[...] += jnp.dot(h.astype(w2_ref.dtype), w2_ref[...],
                            preferred_element_type=jnp.float32)

    @pl.when(f == pl.num_programs(1) - 1)
    def _():
        z = acc_ref[...] + b2_ref[...] + x_ref[...].astype(jnp.float32)
        mu = jnp.mean(z, axis=-1, keepdims=True)
        zc = z - mu
        var = jnp.mean(zc * zc, axis=-1, keepdims=True)
        o_ref[...] = (zc * jax.lax.rsqrt(var + eps) * g_ref[...]
                      + be_ref[...]).astype(o_ref.dtype)


def feed_forward_add_layernorm(x2d, w1, b1, w2, b2, gamma, beta, *,
                               row_tile=256, ff_tile=512, eps=1e-5):
    rows, d_model = x2d.shape
    d_ff = w1.shape[1]
    tile = _choose_row_tile(rows, row_tile)
    xp = _pad_rows(x2d, tile)
    rows_p = xp.shape[0]

    # d_ff is padded (zeros) to a multiple of the reduction tile instead of
    # falling back to a fully-resident W1/W2 slab (v7x VMEM safety).
    d_ff_p = _round_up(d_ff, 128)
    tf = min(ff_tile, d_ff_p)
    d_ff_p = _round_up(d_ff_p, tf)
    if d_ff_p != d_ff:
        pad = d_ff_p - d_ff
        w1 = jnp.pad(w1, ((0, 0), (0, pad)))
        b1 = jnp.pad(b1, ((0, pad),))
        w2 = jnp.pad(w2, ((0, pad), (0, 0)))

    itemsize = xp.dtype.itemsize
    flops = 4 * rows_p * d_model * d_ff
    bytes_accessed = (2 * rows_p * d_model * itemsize
                      + w1.size * w1.dtype.itemsize + w2.size * w2.dtype.itemsize
                      + (b1.size + b2.size + gamma.size + beta.size) * 4)

    # per-step VMEM budget (double-buffered ins/outs + f32 accumulator)
    blk_bytes = (tile * d_model * itemsize          # x
                 + d_model * tf * itemsize          # W1 chunk
                 + tf * 4                           # b1 chunk
                 + tf * d_model * itemsize          # W2 chunk
                 + 3 * d_model * 4                  # b2, gamma, beta
                 + tile * d_model * itemsize)       # out
    vmem_budget = 2 * blk_bytes + tile * d_model * 4 + (4 << 20)
    vmem_limit = int(min(max(vmem_budget, 32 << 20), 64 << 20))

    out = pl.pallas_call(
        functools.partial(_ffn_add_ln_kernel, eps=eps),
        out_shape=jax.ShapeDtypeStruct((rows_p, d_model), x2d.dtype),
        grid_spec=pltpu.PrefetchScalarGridSpec(
            num_scalar_prefetch=0,
            grid=(rows_p // tile, d_ff_p // tf),
            in_specs=[
                pl.BlockSpec((tile, d_model), lambda i, f: (i, 0)),   # x (resident over f)
                pl.BlockSpec((d_model, tf), lambda i, f: (0, f)),     # W1 chunk
                pl.BlockSpec((1, tf), lambda i, f: (0, f)),           # b1 chunk
                pl.BlockSpec((tf, d_model), lambda i, f: (f, 0)),     # W2 chunk
                pl.BlockSpec((1, d_model), lambda i, f: (0, 0)),      # b2
                pl.BlockSpec((1, d_model), lambda i, f: (0, 0)),      # gamma
                pl.BlockSpec((1, d_model), lambda i, f: (0, 0)),      # beta
            ],
            out_specs=pl.BlockSpec((tile, d_model), lambda i, f: (i, 0)),
            scratch_shapes=[pltpu.VMEM((tile, d_model), jnp.float32)],
        ),
        compiler_params=pltpu.CompilerParams(
            dimension_semantics=("parallel", "arbitrary"),
            vmem_limit_bytes=vmem_limit),
        cost_estimate=pl.CostEstimate(flops=int(flops), transcendentals=0,
                                      bytes_accessed=int(bytes_accessed)),
    )(xp, w1, b1.reshape(1, d_ff_p), w2, b2.reshape(1, d_model),
      gamma.reshape(1, d_model), beta.reshape(1, d_model))
    return out[:rows]


# ----------------------------------------------------------------------------
# Encoder layer + stack
# ----------------------------------------------------------------------------
def encoder_layer(x2d, p, *, B, S, n_heads, row_tile):
    d_model = x2d.shape[1]
    dh = d_model // n_heads

    # fused QKV projection (one matmul, one HBM read of x)
    qkv = linear(x2d, p["w_qkv"], p["b_qkv"], row_tile=row_tile)     # (B*S, 3*d_model)
    ctx = attention_core(qkv.reshape(B, S, 3 * d_model),
                         n_heads=n_heads, scale=1.0 / (dh ** 0.5))   # (B, S, d_model)

    # output projection + residual + LN fused
    x1 = proj_add_layernorm(ctx.reshape(B * S, d_model), p["wo"], p["bo"],
                            x2d, p["g1"], p["be1"], row_tile=row_tile)

    # FFN + residual + LN fused
    x2 = feed_forward_add_layernorm(x1, p["w1"], p["b1"], p["w2"], p["b2"],
                                    p["g2"], p["be2"], row_tile=row_tile)
    return x2


@functools.partial(jax.jit, static_argnames=("n_heads", "row_tile"))
def transformer_encoder(x, layer_params, mask=None, *, n_heads, row_tile=256):
    """x: (B, S, d_model) -> (B, S, d_model). Eval-mode forward."""
    # TODO(synk): attention mask not implemented (module default path mask=None).
    B, S, d_model = x.shape
    xb = x.astype(jnp.bfloat16).reshape(B * S, d_model)
    for p in layer_params:
        xb = encoder_layer(xb, p, B=B, S=S, n_heads=n_heads, row_tile=row_tile)
    return xb.reshape(B, S, d_model).astype(x.dtype)


# ----------------------------------------------------------------------------
# Parameter init (weights pre-transposed vs. nn.Linear: (in, out); QKV fused)
# ----------------------------------------------------------------------------
def init_params(key, n_layers, d_model, d_ff):
    def u(k, shape, fan_in, dtype):
        lim = 1.0 / (fan_in ** 0.5)
        return jax.random.uniform(k, shape, dtype, -lim, lim)

    layers = []
    for _ in range(n_layers):
        key, *ks = jax.random.split(key, 9)
        layers.append(dict(
            w_qkv=u(ks[0], (d_model, 3 * d_model), d_model, jnp.bfloat16),
            b_qkv=u(ks[1], (3 * d_model,), d_model, jnp.float32),
            wo=u(ks[2], (d_model, d_model), d_model, jnp.bfloat16),
            bo=u(ks[3], (d_model,), d_model, jnp.float32),
            w1=u(ks[4], (d_model, d_ff), d_model, jnp.bfloat16),
            b1=u(ks[5], (d_ff,), d_model, jnp.float32),
            w2=u(ks[6], (d_ff, d_model), d_ff, jnp.bfloat16),
            b2=u(ks[7], (d_model,), d_ff, jnp.float32),
            g1=jnp.ones((d_model,), jnp.float32),
            be1=jnp.zeros((d_model,), jnp.float32),
            g2=jnp.ones((d_model,), jnp.float32),
            be2=jnp.zeros((d_model,), jnp.float32),
        ))
    return tuple(layers)


# ----------------------------------------------------------------------------
# Pure-JAX reference (same math / cast structure as the kernels)
# ----------------------------------------------------------------------------
def _ref_layer(x2d, p, *, B, S, n_heads):
    d_model = x2d.shape[1]
    dh = d_model // n_heads
    bf16 = jnp.bfloat16

    def lin(t, w, b):
        return (jnp.dot(t, w, preferred_element_type=jnp.float32) + b).astype(bf16)

    def add_ln(z, g, be):
        mu = jnp.mean(z, -1, keepdims=True)
        zc = z - mu
        var = jnp.mean(zc * zc, -1, keepdims=True)
        return (zc * jax.lax.rsqrt(var + 1e-5) * g + be).astype(bf16)

    qkv = lin(x2d, p["w_qkv"], p["b_qkv"])
    q, k, v = (qkv[:, :d_model], qkv[:, d_model:2 * d_model],
               qkv[:, 2 * d_model:])

    def split(t):
        return t.reshape(B, S, n_heads, dh).transpose(0, 2, 1, 3)

    qh, kh, vh = split(q), split(k), split(v)
    s = jnp.einsum("bhqd,bhkd->bhqk", qh, kh,
                   preferred_element_type=jnp.float32) * (1.0 / dh ** 0.5)
    s = s - jnp.max(s, axis=-1, keepdims=True)
    pm = jnp.exp(s)
    pm = pm / jnp.sum(pm, axis=-1, keepdims=True)
    a = jnp.einsum("bhqk,bhkd->bhqd", pm.astype(bf16), vh,
                   preferred_element_type=jnp.float32)
    a = a.transpose(0, 2, 1, 3).reshape(B * S, d_model).astype(bf16)

    y = jnp.dot(a, p["wo"], preferred_element_type=jnp.float32) + p["bo"]
    x1 = add_ln(y + x2d.astype(jnp.float32), p["g1"], p["be1"])

    h = jnp.maximum(
        jnp.dot(x1, p["w1"], preferred_element_type=jnp.float32) + p["b1"], 0.0)
    f = (jnp.dot(h.astype(bf16), p["w2"], preferred_element_type=jnp.float32)
         + p["b2"])
    x2 = add_ln(f + x1.astype(jnp.float32), p["g2"], p["be2"])
    return x2


def ref_encoder(x, layer_params, *, n_heads):
    B, S, d = x.shape
    xb = x.astype(jnp.bfloat16).reshape(B * S, d)
    for p in layer_params:
        xb = _ref_layer(xb, p, B=B, S=S, n_heads=n_heads)
    return xb.reshape(B, S, d).astype(x.dtype)


# ----------------------------------------------------------------------------
if __name__ == "__main__":
    # Small shapes consistent with TransformerEncoder(EncoderLayer(d_model, n_heads, d_ff), n_layers)
    B, S, d_model, n_heads, d_ff, n_layers = 2, 16, 128, 4, 256, 2

    key = jax.random.PRNGKey(0)
    kx, kp = jax.random.split(key)
    x = jax.random.normal(kx, (B, S, d_model), dtype=jnp.float32)
    params = init_params(kp, n_layers, d_model, d_ff)

    out = transformer_encoder(x, params, n_heads=n_heads)
    out = jax.block_until_ready(out)

    ref = ref_encoder(x, params, n_heads=n_heads)
    assert out.shape == (B, S, d_model)
    max_err = float(jnp.max(jnp.abs(out - ref)))
    assert jnp.allclose(out, ref, atol=5e-2, rtol=5e-2), f"max abs err {max_err}"

    print("KERNEL_OK")
</pallas_src>

<mosaic_0001>
module attributes {stable_mosaic.version = 11 : i64} {
  func.func @_linear_kernel(%arg0: i32, %arg1: memref<32x128xbf16, #tpu.memory_space<vmem>>, %arg2: memref<128x384xbf16, #tpu.memory_space<vmem>>, %arg3: memref<1x384xf32, #tpu.memory_space<vmem>>, %arg4: memref<32x384xbf16, #tpu.memory_space<vmem>>) attributes {dimension_semantics = [#tpu.dimension_semantics<parallel>], iteration_bounds = array<i64: 1>, scalar_prefetch = 0 : i64, scratch_operands = 0 : i64, tpu.core_type = #tpu.core_type<tc>, window_params = [{transform_indices = @transform_0, window_bounds = array<i64: 32, 128>}, {pipeline_mode = #tpu.pipeline_mode<synchronous>, transform_indices = @transform_1, window_bounds = array<i64: 128, 384>}, {pipeline_mode = #tpu.pipeline_mode<synchronous>, transform_indices = @transform_2, window_bounds = array<i64: 1, 384>}, {transform_indices = @transform_3, window_bounds = array<i64: 32, 384>}]} {
    %c0 = arith.constant 0 : index
    %c0_0 = arith.constant 0 : index
    %0 = vector.load %arg1[%c0, %c0_0] : memref<32x128xbf16, #tpu.memory_space<vmem>>, vector<32x128xbf16>
    %c0_1 = arith.constant 0 : index
    %c0_2 = arith.constant 0 : index
    %1 = vector.load %arg2[%c0_1, %c0_2] : memref<128x384xbf16, #tpu.memory_space<vmem>>, vector<128x384xbf16>
    %cst = arith.constant dense<0.000000e+00> : vector<32x384xf32>
    %2 = tpu.matmul %0, %1, %cst {dimension_numbers = #tpu.dot_dimension_numbers<[1], [0], [0], [1], [0, 0, 1, 1], [], []>} : vector<32x128xbf16>, vector<128x384xbf16>, vector<32x384xf32> -> vector<32x384xf32>
    %c0_3 = arith.constant 0 : index
    %c0_4 = arith.constant 0 : index
    %3 = vector.load %arg3[%c0_3, %c0_4] : memref<1x384xf32, #tpu.memory_space<vmem>>, vector<1x384xf32>
    %4 = vector.broadcast %3 : vector<1x384xf32> to vector<32x384xf32>
    %5 = arith.addf %2, %4 : vector<32x384xf32>
    %6 = arith.truncf %5 : vector<32x384xf32> to vector<32x384xbf16>
    %c0_5 = arith.constant 0 : index
    %c0_6 = arith.constant 0 : index
    %7 = vector.load %arg4[%c0_5, %c0_6] : memref<32x384xbf16, #tpu.memory_space<vmem>>, vector<32x384xbf16>
    tpu.vector_store %arg4[%c0_5, %c0_6], %6 {strides = array<i32>} : memref<32x384xbf16, #tpu.memory_space<vmem>>, vector<32x384xbf16>,
    return
  }
  func.func @transform_0(%arg0: i32) -> (i32, i32) {
    %c0_i32 = arith.constant 0 : i32
    %c0_i32_0 = arith.constant 0 : i32
    return %arg0, %c0_i32 : i32, i32
  }
  func.func @transform_1(%arg0: i32) -> (i32, i32) {
    %c0_i32 = arith.constant 0 : i32
    %c0_i32_0 = arith.constant 0 : i32
    %c0_i32_1 = arith.constant 0 : i32
    return %c0_i32, %c0_i32_0 : i32, i32
  }
  func.func @transform_2(%arg0: i32) -> (i32, i32) {
    %c0_i32 = arith.constant 0 : i32
    %c0_i32_0 = arith.constant 0 : i32
    %c0_i32_1 = arith.constant 0 : i32
    return %c0_i32, %c0_i32_0 : i32, i32
  }
  func.func @transform_3(%arg0: i32) -> (i32, i32) {
    %c0_i32 = arith.constant 0 : i32
    %c0_i32_0 = arith.constant 0 : i32
    return %arg0, %c0_i32 : i32, i32
  }
}

module attributes {stable_mosaic.version = 11 : i64} {
  func.func @_attn_kernel(%arg0: i32, %arg1: memref<1x16x384xbf16, #tpu.memory_space<vmem>>, %arg2: memref<1x16x128xbf16, #tpu.memory_space<vmem>>) attributes {dimension_semantics = [#tpu.dimension_semantics<parallel>], iteration_bounds = array<i64: 2>, scalar_prefetch = 0 : i64, scratch_operands = 0 : i64, tpu.core_type = #tpu.core_type<tc>, window_params = [{transform_indices = @transform_0, window_bounds = array<i64: 1, 16, 384>}, {transform_indices = @transform_1, window_bounds = array<i64: 1, 16, 128>}]} {
    %c0 = arith.constant 0 : index
    %c0_0 = arith.constant 0 : index
    %c0_1 = arith.constant 0 : index
    %0 = vector.load %arg1[%c0, %c0_0, %c0_1] : memref<1x16x384xbf16, #tpu.memory_space<vmem>>, vector<1x16x384xbf16>
    %1 = vector.shape_cast %0 : vector<1x16x384xbf16> to vector<16x384xbf16>
    %2 = vector.extract_strided_slice %1 {offsets = [0, 0], sizes = [16, 32], strides = [1, 1]} : vector<16x384xbf16> to vector<16x32xbf16>
    %cst = arith.constant 1.767580e-01 : bf16
    %3 = vector.broadcast %cst : bf16 to vector<16x32xbf16>
    %4 = arith.mulf %2, %3 : vector<16x32xbf16>
    %5 = vector.extract_strided_slice %1 {offsets = [0, 128], sizes = [16, 32], strides = [1, 1]} : vector<16x384xbf16> to vector<16x32xbf16>
    %6 = vector.extract_strided_slice %1 {offsets = [0, 256], sizes = [16, 32], strides = [1, 1]} : vector<16x384xbf16> to vector<16x32xbf16>
    %cst_2 = arith.constant dense<0.000000e+00> : vector<16x16xf32>
    %7 = tpu.matmul %4, %5, %cst_2 {dimension_numbers = #tpu.dot_dimension_numbers<[1], [1], [0], [0], [0, 0, 1, 0], [], []>} : vector<16x32xbf16>, vector<16x32xbf16>, vector<16x16xf32> -> vector<16x16xf32>
    %cst_3 = arith.constant dense<0xFF800000> : vector<16xf32>
    %8 = vector.multi_reduction <maximumf>, %7, %cst_3 [1] : vector<16x16xf32> to vector<16xf32>
    %9 = vector.shape_cast %8 : vector<16xf32> to vector<16x1xf32>
    %10 = vector.broadcast %9 : vector<16x1xf32> to vector<16x16xf32>
    %11 = arith.subf %7, %10 : vector<16x16xf32>
    %12 = math.exp %11 : vector<16x16xf32>
    %cst_4 = arith.constant dense<0.000000e+00> : vector<16xf32>
    %13 = vector.multi_reduction <add>, %12, %cst_4 [1] : vector<16x16xf32> to vector<16xf32>
    %14 = vector.shape_cast %13 : vector<16xf32> to vector<16x1xf32>
    %15 = arith.truncf %12 : vector<16x16xf32> to vector<16x16xbf16>
    %cst_5 = arith.constant dense<0.000000e+00> : vector<16x32xf32>
    %16 = tpu.matmul %15, %6, %cst_5 {dimension_numbers = #tpu.dot_dimension_numbers<[1], [0], [0], [1], [0, 0, 1, 1], [], []>} : vector<16x16xbf16>, vector<16x32xbf16>, vector<16x32xf32> -> vector<16x32xf32>
    %17 = tpu.reciprocal %14 {approx = true} : vector<16x1xf32> -> vector<16x1xf32>
    %18 = vector.broadcast %17 : vector<16x1xf32> to vector<16x32xf32>
    %19 = arith.mulf %16, %18 : vector<16x32xf32>
    %20 = vector.extract_strided_slice %1 {offsets = [0, 32], sizes = [16, 32], strides = [1, 1]} : vector<16x384xbf16> to vector<16x32xbf16>
    %cst_6 = arith.constant 1.767580e-01 : bf16
    %21 = vector.broadcast %cst_6 : bf16 to vector<16x32xbf16>
    %22 = arith.mulf %20, %21 : vector<16x32xbf16>
    %23 = vector.extract_strided_slice %1 {offsets = [0, 160], sizes = [16, 32], strides = [1, 1]} : vector<16x384xbf16> to vector<16x32xbf16>
    %24 = vector.extract_strided_slice %1 {offsets = [0, 288], sizes = [16, 32], strides = [1, 1]} : vector<16x384xbf16> to vector<16x32xbf16>
    %cst_7 = arith.constant dense<0.000000e+00> : vector<16x16xf32>
    %25 = tpu.matmul %22, %23, %cst_7 {dimension_numbers = #tpu.dot_dimension_numbers<[1], [1], [0], [0], [0, 0, 1, 0], [], []>} : vector<16x32xbf16>, vector<16x32xbf16>, vector<16x16xf32> -> vector<16x16xf32>
    %cst_8 = arith.constant dense<0xFF800000> : vector<16xf32>
    %26 = vector.multi_reduction <maximumf>, %25, %cst_8 [1] : vector<16x16xf32> to vector<16xf32>
    %27 = vector.shape_cast %26 : vector<16xf32> to vector<16x1xf32>
    %28 = vector.broadcast %27 : vector<16x1xf32> to vector<16x16xf32>
    %29 = arith.subf %25, %28 : vector<16x16xf32>
    %30 = math.exp %29 : vector<16x16xf32>
    %cst_9 = arith.constant dense<0.000000e+00> : vector<16xf32>
    %31 = vector.multi_reduction <add>, %30, %cst_9 [1] : vector<16x16xf32> to vector<16xf32>
    %32 = vector.shape_cast %31 : vector<16xf32> to vector<16x1xf32>
    %33 = arith.truncf %30 : vector<16x16xf32> to vector<16x16xbf16>
    %cst_10 = arith.constant dense<0.000000e+00> : vector<16x32xf32>
    %34 = tpu.matmul %33, %24, %cst_10 {dimension_numbers = #tpu.dot_dimension_numbers<[1], [0], [0], [1], [0, 0, 1, 1], [], []>} : vector<16x16xbf16>, vector<16x32xbf16>, vector<16x32xf32> -> vector<16x32xf32>
    %35 = tpu.reciprocal %32 {approx = true} : vector<16x1xf32> -> vector<16x1xf32>
    %36 = vector.broadcast %35 : vector<16x1xf32> to vector<16x32xf32>
    %37 = arith.mulf %34, %36 : vector<16x32xf32>
    %38 = vector.extract_strided_slice %1 {offsets = [0, 64], sizes = [16, 32], strides = [1, 1]} : vector<16x384xbf16> to vector<16x32xbf16>
    %cst_11 = arith.constant 1.767580e-01 : bf16
    %39 = vector.broadcast %cst_11 : bf16 to vector<16x32xbf16>
    %40 = arith.mulf %38, %39 : vector<16x32xbf16>
    %41 = vector.extract_strided_slice %1 {offsets = [0, 192], sizes = [16, 32], strides = [1, 1]} : vector<16x384xbf16> to vector<16x32xbf16>
    %42 = vector.extract_strided_slice %1 {offsets = [0, 320], sizes = [16, 32], strides = [1, 1]} : vector<16x384xbf16> to vector<16x32xbf16>
    %cst_12 = arith.constant dense<0.000000e+00> : vector<16x16xf32>
    %43 = tpu.matmul %40, %41, %cst_12 {dimension_numbers = #tpu.dot_dimension_numbers<[1], [1], [0], [0], [0, 0, 1, 0], [], []>} : vector<16x32xbf16>, vector<16x32xbf16>, vector<16x16xf32> -> vector<16x16xf32>
    %cst_13 = arith.constant dense<0xFF800000> : vector<16xf32>
    %44 = vector.multi_reduction <maximumf>, %43, %cst_13 [1] : vector<16x16xf32> to vector<16xf32>
    %45 = vector.shape_cast %44 : vector<16xf32> to vector<16x1xf32>
    %46 = vector.broadcast %45 : vector<16x1xf32> to vector<16x16xf32>
    %47 = arith.subf %43, %46 : vector<16x16xf32>
    %48 = math.exp %47 : vector<16x16xf32>
    %cst_14 = arith.constant dense<0.000000e+00> : vector<16xf32>
    %49 = vector.multi_reduction <add>, %48, %cst_14 [1] : vector<16x16xf32> to vector<16xf32>
    %50 = vector.shape_cast %49 : vector<16xf32> to vector<16x1xf32>
    %51 = arith.truncf %48 : vector<16x16xf32> to vector<16x16xbf16>
    %cst_15 = arith.constant dense<0.000000e+00> : vector<16x32xf32>
    %52 = tpu.matmul %51, %42, %cst_15 {dimension_numbers = #tpu.dot_dimension_numbers<[1], [0], [0], [1], [0, 0, 1, 1], [], []>} : vector<16x16xbf16>, vector<16x32xbf16>, vector<16x32xf32> -> vector<16x32xf32>
    %53 = tpu.reciprocal %50 {approx = true} : vector<16x1xf32> -> vector<16x1xf32>
    %54 = vector.broadcast %53 : vector<16x1xf32> to vector<16x32xf32>
    %55 = arith.mulf %52, %54 : vector<16x32xf32>
    %56 = vector.extract_strided_slice %1 {offsets = [0, 96], sizes = [16, 32], strides = [1, 1]} : vector<16x384xbf16> to vector<16x32xbf16>
    %cst_16 = arith.constant 1.767580e-01 : bf16
    %57 = vector.broadcast %cst_16 : bf16 to vector<16x32xbf16>
    %58 = arith.mulf %56, %57 : vector<16x32xbf16>
    %59 = vector.extract_strided_slice %1 {offsets = [0, 224], sizes = [16, 32], strides = [1, 1]} : vector<16x384xbf16> to vector<16x32xbf16>
    %60 = vector.extract_strided_slice %1 {offsets = [0, 352], sizes = [16, 32], strides = [1, 1]} : vector<16x384xbf16> to vector<16x32xbf16>
    %cst_17 = arith.constant dense<0.000000e+00> : vector<16x16xf32>
    %61 = tpu.matmul %58, %59, %cst_17 {dimension_numbers = #tpu.dot_dimension_numbers<[1], [1], [0], [0], [0, 0, 1, 0], [], []>} : vector<16x32xbf16>, vector<16x32xbf16>, vector<16x16xf32> -> vector<16x16xf32>
    %cst_18 = arith.constant dense<0xFF800000> : vector<16xf32>
    %62 = vector.multi_reduction <maximumf>, %61, %cst_18 [1] : vector<16x16xf32> to vector<16xf32>
    %63 = vector.shape_cast %62 : vector<16xf32> to vector<16x1xf32>
    %64 = vector.broadcast %63 : vector<16x1xf32> to vector<16x16xf32>
    %65 = arith.subf %61, %64 : vector<16x16xf32>
    %66 = math.exp %65 : vector<16x16xf32>
    %cst_19 = arith.constant dense<0.000000e+00> : vector<16xf32>
    %67 = vector.multi_reduction <add>, %66, %cst_19 [1] : vector<16x16xf32> to vector<16xf32>
    %68 = vector.shape_cast %67 : vector<16xf32> to vector<16x1xf32>
    %69 = arith.truncf %66 : vector<16x16xf32> to vector<16x16xbf16>
    %cst_20 = arith.constant dense<0.000000e+00> : vector<16x32xf32>
    %70 = tpu.matmul %69, %60, %cst_20 {dimension_numbers = #tpu.dot_dimension_numbers<[1], [0], [0], [1], [0, 0, 1, 1], [], []>} : vector<16x16xbf16>, vector<16x32xbf16>, vector<16x32xf32> -> vector<16x32xf32>
    %71 = tpu.reciprocal %68 {approx = true} : vector<16x1xf32> -> vector<16x1xf32>
    %72 = vector.broadcast %71 : vector<16x1xf32> to vector<16x32xf32>
    %73 = arith.mulf %70, %72 : vector<16x32xf32>
    %74 = tpu.concatenate %19, %37, %55, %73 in 1 : vector<16x32xf32>, vector<16x32xf32>, vector<16x32xf32>, vector<16x32xf32> -> vector<16x128xf32>
    %75 = arith.truncf %74 : vector<16x128xf32> to vector<16x128xbf16>
    %c0_21 = arith.constant 0 : index
    %c0_22 = arith.constant 0 : index
    %c0_23 = arith.constant 0 : index
    %76 = vector.load %arg2[%c0_21, %c0_22, %c0_23] : memref<1x16x128xbf16, #tpu.memory_space<vmem>>, vector<1x16x128xbf16>
    %77 = vector.shape_cast %76 : vector<1x16x128xbf16> to vector<16x128xbf16>
    %78 = vector.shape_cast %75 : vector<16x128xbf16> to vector<1x16x128xbf16>
    tpu.vector_store %arg2[%c0_21, %c0_22, %c0_23], %78 {strides = array<i32>} : memref<1x16x128xbf16, #tpu.memory_space<vmem>>, vector<1x16x128xbf16>,
    return
  }
  func.func @transform_0(%arg0: i32) -> (i32, i32, i32) {
    %c0_i32 = arith.constant 0 : i32
    %c0_i32_0 = arith.constant 0 : i32
    %c0_i32_1 = arith.constant 0 : i32
    return %arg0, %c0_i32, %c0_i32_0 : i32, i32, i32
  }
  func.func @transform_1(%arg0: i32) -> (i32, i32, i32) {
    %c0_i32 = arith.constant 0 : i32
    %c0_i32_0 = arith.constant 0 : i32
    %c0_i32_1 = arith.constant 0 : i32
    return %arg0, %c0_i32, %c0_i32_0 : i32, i32, i32
  }
}

module attributes {stable_mosaic.version = 11 : i64} {
  func.func @_proj_add_ln_kernel(%arg0: i32, %arg1: memref<32x128xbf16, #tpu.memory_space<vmem>>, %arg2: memref<128x128xbf16, #tpu.memory_space<vmem>>, %arg3: memref<1x128xf32, #tpu.memory_space<vmem>>, %arg4: memref<32x128xbf16, #tpu.memory_space<vmem>>, %arg5: memref<1x128xf32, #tpu.memory_space<vmem>>, %arg6: memref<1x128xf32, #tpu.memory_space<vmem>>, %arg7: memref<32x128xbf16, #tpu.memory_space<vmem>>) attributes {dimension_semantics = [#tpu.dimension_semantics<parallel>], iteration_bounds = array<i64: 1>, scalar_prefetch = 0 : i64, scratch_operands = 0 : i64, tpu.core_type = #tpu.core_type<tc>, window_params = [{transform_indices = @transform_0, window_bounds = array<i64: 32, 128>}, {pipeline_mode = #tpu.pipeline_mode<synchronous>, transform_indices = @transform_1, window_bounds = array<i64: 128, 128>}, {pipeline_mode = #tpu.pipeline_mode<synchronous>, transform_indices = @transform_2, window_bounds = array<i64: 1, 128>}, {transform_indices = @transform_3, window_bounds = array<i64: 32, 128>}, {pipeline_mode = #tpu.pipeline_mode<synchronous>, transform_indices = @transform_4, window_bounds = array<i64: 1, 128>}, {pipeline_mode = #tpu.pipeline_mode<synchronous>, transform_indices = @transform_5, window_bounds = array<i64: 1, 128>}, {transform_indices = @transform_6, window_bounds = array<i64: 32, 128>}]} {
    %c0 = arith.constant 0 : index
    %c0_0 = arith.constant 0 : index
    %0 = vector.load %arg1[%c0, %c0_0] : memref<32x128xbf16, #tpu.memory_space<vmem>>, vector<32x128xbf16>
    %c0_1 = arith.constant 0 : index
    %c0_2 = arith.constant 0 : index
    %1 = vector.load %arg2[%c0_1, %c0_2] : memref<128x128xbf16, #tpu.memory_space<vmem>>, vector<128x128xbf16>
    %cst = arith.constant dense<0.000000e+00> : vector<32x128xf32>
    %2 = tpu.matmul %0, %1, %cst {dimension_numbers = #tpu.dot_dimension_numbers<[1], [0], [0], [1], [0, 0, 1, 1], [], []>} : vector<32x128xbf16>, vector<128x128xbf16>, vector<32x128xf32> -> vector<32x128xf32>
    %c0_3 = arith.constant 0 : index
    %c0_4 = arith.constant 0 : index
    %3 = vector.load %arg3[%c0_3, %c0_4] : memref<1x128xf32, #tpu.memory_space<vmem>>, vector<1x128xf32>
    %4 = vector.broadcast %3 : vector<1x128xf32> to vector<32x128xf32>
    %5 = arith.addf %2, %4 : vector<32x128xf32>
    %c0_5 = arith.constant 0 : index
    %c0_6 = arith.constant 0 : index
    %6 = vector.load %arg4[%c0_5, %c0_6] : memref<32x128xbf16, #tpu.memory_space<vmem>>, vector<32x128xbf16>
    %7 = arith.extf %6 : vector<32x128xbf16> to vector<32x128xf32>
    %8 = arith.addf %5, %7 : vector<32x128xf32>
    %cst_7 = arith.constant dense<0.000000e+00> : vector<32xf32>
    %9 = vector.multi_reduction <add>, %8, %cst_7 [1] : vector<32x128xf32> to vector<32xf32>
    %10 = vector.shape_cast %9 : vector<32xf32> to vector<32x1xf32>
    %cst_8 = arith.constant 1.280000e+02 : f32
    %11 = vector.broadcast %cst_8 : f32 to vector<32x1xf32>
    %12 = arith.divf %10, %11 : vector<32x1xf32>
    %13 = vector.broadcast %12 : vector<32x1xf32> to vector<32x128xf32>
    %14 = arith.subf %8, %13 : vector<32x128xf32>
    %15 = arith.mulf %14, %14 : vector<32x128xf32>
    %cst_9 = arith.constant dense<0.000000e+00> : vector<32xf32>
    %16 = vector.multi_reduction <add>, %15, %cst_9 [1] : vector<32x128xf32> to vector<32xf32>
    %17 = vector.shape_cast %16 : vector<32xf32> to vector<32x1xf32>
    %cst_10 = arith.constant 1.280000e+02 : f32
    %18 = vector.broadcast %cst_10 : f32 to vector<32x1xf32>
    %19 = arith.divf %17, %18 : vector<32x1xf32>
    %cst_11 = arith.constant 9.99999974E-6 : f32
    %20 = vector.broadcast %cst_11 : f32 to vector<32x1xf32>
    %21 = arith.addf %19, %20 : vector<32x1xf32>
    %22 = math.rsqrt %21 : vector<32x1xf32>
    %23 = vector.broadcast %22 : vector<32x1xf32> to vector<32x128xf32>
    %24 = arith.mulf %14, %23 : vector<32x128xf32>
    %c0_12 = arith.constant 0 : index
    %c0_13 = arith.constant 0 : index
    %25 = vector.load %arg5[%c0_12, %c0_13] : memref<1x128xf32, #tpu.memory_space<vmem>>, vector<1x128xf32>
    %26 = vector.broadcast %25 : vector<1x128xf32> to vector<32x128xf32>
    %27 = arith.mulf %24, %26 : vector<32x128xf32>
    %c0_14 = arith.constant 0 : index
    %c0_15 = arith.constant 0 : index
    %28 = vector.load %arg6[%c0_14, %c0_15] : memref<1x128xf32, #tpu.memory_space<vmem>>, vector<1x128xf32>
    %29 = vector.broadcast %28 : vector<1x128xf32> to vector<32x128xf32>
    %30 = arith.addf %27, %29 : vector<32x128xf32>
    %31 = arith.truncf %30 : vector<32x128xf32> to vector<32x128xbf16>
    %c0_16 = arith.constant 0 : index
    %c0_17 = arith.constant 0 : index
    %32 = vector.load %arg7[%c0_16, %c0_17] : memref<32x128xbf16, #tpu.memory_space<vmem>>, vector<32x128xbf16>
    tpu.vector_store %arg7[%c0_16, %c0_17], %31 {strides = array<i32>} : memref<32x128xbf16, #tpu.memory_space<vmem>>, vector<32x128xbf16>,
    return
  }
  func.func @transform_0(%arg0: i32) -> (i32, i32) {
    %c0_i32 = arith.constant 0 : i32
    %c0_i32_0 = arith.constant 0 : i32
    return %arg0, %c0_i32 : i32, i32
  }
  func.func @transform_1(%arg0: i32) -> (i32, i32) {
    %c0_i32 = arith.constant 0 : i32
    %c0_i32_0 = arith.constant 0 : i32
    %c0_i32_1 = arith.constant 0 : i32
    return %c0_i32, %c0_i32_0 : i32, i32
  }
  func.func @transform_2(%arg0: i32) -> (i32, i32) {
    %c0_i32 = arith.constant 0 : i32
    %c0_i32_0 = arith.constant 0 : i32
    %c0_i32_1 = arith.constant 0 : i32
    return %c0_i32, %c0_i32_0 : i32, i32
  }
  func.func @transform_3(%arg0: i32) -> (i32, i32) {
    %c0_i32 = arith.constant 0 : i32
    %c0_i32_0 = arith.constant 0 : i32
    return %arg0, %c0_i32 : i32, i32
  }
  func.func @transform_4(%arg0: i32) -> (i32, i32) {
    %c0_i32 = arith.constant 0 : i32
    %c0_i32_0 = arith.constant 0 : i32
    %c0_i32_1 = arith.constant 0 : i32
    return %c0_i32, %c0_i32_0 : i32, i32
  }
  func.func @transform_5(%arg0: i32) -> (i32, i32) {
    %c0_i32 = arith.constant 0 : i32
    %c0_i32_0 = arith.constant 0 : i32
    %c0_i32_1 = arith.constant 0 : i32
    return %c0_i32, %c0_i32_0 : i32, i32
  }
  func.func @transform_6(%arg0: i32) -> (i32, i32) {
    %c0_i32 = arith.constant 0 : i32
    %c0_i32_0 = arith.constant 0 : i32
    return %arg0, %c0_i32 : i32, i32
  }
}

module attributes {stable_mosaic.version = 11 : i64} {
  func.func @_ffn_add_ln_kernel(%arg0: i32, %arg1: i32, %arg2: memref<32x128xbf16, #tpu.memory_space<vmem>>, %arg3: memref<128x256xbf16, #tpu.memory_space<vmem>>, %arg4: memref<1x256xf32, #tpu.memory_space<vmem>>, %arg5: memref<256x128xbf16, #tpu.memory_space<vmem>>, %arg6: memref<1x128xf32, #tpu.memory_space<vmem>>, %arg7: memref<1x128xf32, #tpu.memory_space<vmem>>, %arg8: memref<1x128xf32, #tpu.memory_space<vmem>>, %arg9: memref<32x128xbf16, #tpu.memory_space<vmem>>, %arg10: memref<32x128xf32, #tpu.memory_space<vmem>>) attributes {dimension_semantics = [#tpu.dimension_semantics<parallel>, #tpu.dimension_semantics<arbitrary>], iteration_bounds = array<i64: 1, 1>, scalar_prefetch = 0 : i64, scratch_operands = 1 : i64, tpu.core_type = #tpu.core_type<tc>, window_params = [{transform_indices = @transform_0, window_bounds = array<i64: 32, 128>}, {transform_indices = @transform_1, window_bounds = array<i64: 128, 256>}, {transform_indices = @transform_2, window_bounds = array<i64: 1, 256>}, {transform_indices = @transform_3, window_bounds = array<i64: 256, 128>}, {pipeline_mode = #tpu.pipeline_mode<synchronous>, transform_indices = @transform_4, window_bounds = array<i64: 1, 128>}, {pipeline_mode = #tpu.pipeline_mode<synchronous>, transform_indices = @transform_5, window_bounds = array<i64: 1, 128>}, {pipeline_mode = #tpu.pipeline_mode<synchronous>, transform_indices = @transform_6, window_bounds = array<i64: 1, 128>}, {transform_indices = @transform_7, window_bounds = array<i64: 32, 128>}]} {
    %c0_i32 = arith.constant 0 : i32
    %0 = arith.cmpi eq, %arg1, %c0_i32 : i32
    %1 = arith.extui %0 : i1 to i32
    %c0_i32_0 = arith.constant 0 : i32
    %2 = arith.cmpi ne, %1, %c0_i32_0 : i32
    scf.if %2 {
      %cst_16 = arith.constant 0.000000e+00 : f32
      %20 = vector.broadcast %cst_16 : f32 to vector<32x128xf32>
      %c0_17 = arith.constant 0 : index
      %c0_18 = arith.constant 0 : index
      %21 = vector.load %arg10[%c0_17, %c0_18] : memref<32x128xf32, #tpu.memory_space<vmem>>, vector<32x128xf32>
      tpu.vector_store %arg10[%c0_17, %c0_18], %20 {strides = array<i32>} : memref<32x128xf32, #tpu.memory_space<vmem>>, vector<32x128xf32>,
    } else {
    }
    %c0 = arith.constant 0 : index
    %c0_1 = arith.constant 0 : index
    %3 = vector.load %arg2[%c0, %c0_1] : memref<32x128xbf16, #tpu.memory_space<vmem>>, vector<32x128xbf16>
    %c0_2 = arith.constant 0 : index
    %c0_3 = arith.constant 0 : index
    %4 = vector.load %arg3[%c0_2, %c0_3] : memref<128x256xbf16, #tpu.memory_space<vmem>>, vector<128x256xbf16>
    %cst = arith.constant dense<0.000000e+00> : vector<32x256xf32>
    %5 = tpu.matmul %3, %4, %cst {dimension_numbers = #tpu.dot_dimension_numbers<[1], [0], [0], [1], [0, 0, 1, 1], [], []>} : vector<32x128xbf16>, vector<128x256xbf16>, vector<32x256xf32> -> vector<32x256xf32>
    %c0_4 = arith.constant 0 : index
    %c0_5 = arith.constant 0 : index
    %6 = vector.load %arg4[%c0_4, %c0_5] : memref<1x256xf32, #tpu.memory_space<vmem>>, vector<1x256xf32>
    %7 = vector.broadcast %6 : vector<1x256xf32> to vector<32x256xf32>
    %8 = arith.addf %5, %7 : vector<32x256xf32>
    %cst_6 = arith.constant 0.000000e+00 : f32
    %9 = vector.broadcast %cst_6 : f32 to vector<32x256xf32>
    %10 = arith.maximumf %8, %9 : vector<32x256xf32>
    %c0_7 = arith.constant 0 : index
    %c0_8 = arith.constant 0 : index
    %11 = vector.load %arg10[%c0_7, %c0_8] : memref<32x128xf32, #tpu.memory_space<vmem>>, vector<32x128xf32>
    %12 = arith.truncf %10 : vector<32x256xf32> to vector<32x256xbf16>
    %c0_9 = arith.constant 0 : index
    %c0_10 = arith.constant 0 : index
    %13 = vector.load %arg5[%c0_9, %c0_10] : memref<256x128xbf16, #tpu.memory_space<vmem>>, vector<256x128xbf16>
    %cst_11 = arith.constant dense<0.000000e+00> : vector<32x128xf32>
    %14 = tpu.matmul %12, %13, %cst_11 {dimension_numbers = #tpu.dot_dimension_numbers<[1], [0], [0], [1], [0, 0, 1, 1], [], []>} : vector<32x256xbf16>, vector<256x128xbf16>, vector<32x128xf32> -> vector<32x128xf32>
    %15 = arith.addf %11, %14 : vector<32x128xf32>
    %c0_12 = arith.constant 0 : index
    %c0_13 = arith.constant 0 : index
    %16 = vector.load %arg10[%c0_12, %c0_13] : memref<32x128xf32, #tpu.memory_space<vmem>>, vector<32x128xf32>
    tpu.vector_store %arg10[%c0_12, %c0_13], %15 {strides = array<i32>} : memref<32x128xf32, #tpu.memory_space<vmem>>, vector<32x128xf32>,
    %c0_i32_14 = arith.constant 0 : i32
    %17 = arith.cmpi eq, %arg1, %c0_i32_14 : i32
    %18 = arith.extui %17 : i1 to i32
    %c0_i32_15 = arith.constant 0 : i32
    %19 = arith.cmpi ne, %18, %c0_i32_15 : i32
    scf.if %19 {
      %c0_16 = arith.constant 0 : index
      %c0_17 = arith.constant 0 : index
      %20 = vector.load %arg10[%c0_16, %c0_17] : memref<32x128xf32, #tpu.memory_space<vmem>>, vector<32x128xf32>
      %c0_18 = arith.constant 0 : index
      %c0_19 = arith.constant 0 : index
      %21 = vector.load %arg6[%c0_18, %c0_19] : memref<1x128xf32, #tpu.memory_space<vmem>>, vector<1x128xf32>
      %22 = vector.broadcast %21 : vector<1x128xf32> to vector<32x128xf32>
      %23 = arith.addf %20, %22 : vector<32x128xf32>
      %c0_20 = arith.constant 0 : index
      %c0_21 = arith.constant 0 : index
      %24 = vector.load %arg2[%c0_20, %c0_21] : memref<32x128xbf16, #tpu.memory_space<vmem>>, vector<32x128xbf16>
      %25 = arith.extf %24 : vector<32x128xbf16> to vector<32x128xf32>
      %26 = arith.addf %23, %25 : vector<32x128xf32>
      %cst_22 = arith.constant dense<0.000000e+00> : vector<32xf32>
      %27 = vector.multi_reduction <add>, %26, %cst_22 [1] : vector<32x128xf32> to vector<32xf32>
      %28 = vector.shape_cast %27 : vector<32xf32> to vector<32x1xf32>
      %cst_23 = arith.constant 1.280000e+02 : f32
      %29 = vector.broadcast %cst_23 : f32 to vector<32x1xf32>
      %30 = arith.divf %28, %29 : vector<32x1xf32>
      %31 = vector.broadcast %30 : vector<32x1xf32> to vector<32x128xf32>
      %32 = arith.subf %26, %31 : vector<32x128xf32>
      %33 = arith.mulf %32, %32 : vector<32x128xf32>
      %cst_24 = arith.constant dense<0.000000e+00> : vector<32xf32>
      %34 = vector.multi_reduction <add>, %33, %cst_24 [1] : vector<32x128xf32> to vector<32xf32>
      %35 = vector.shape_cast %34 : vector<32xf32> to vector<32x1xf32>
      %cst_25 = arith.constant 1.280000e+02 : f32
      %36 = vector.broadcast %cst_25 : f32 to vector<32x1xf32>
      %37 = arith.divf %35, %36 : vector<32x1xf32>
      %cst_26 = arith.constant 9.99999974E-6 : f32
      %38 = vector.broadcast %cst_26 : f32 to vector<32x1xf32>
      %39 = arith.addf %37, %38 : vector<32x1xf32>
      %40 = math.rsqrt %39 : vector<32x1xf32>
      %41 = vector.broadcast %40 : vector<32x1xf32> to vector<32x128xf32>
      %42 = arith.mulf %32, %41 : vector<32x128xf32>
      %c0_27 = arith.constant 0 : index
      %c0_28 = arith.constant 0 : index
      %43 = vector.load %arg7[%c0_27, %c0_28] : memref<1x128xf32, #tpu.memory_space<vmem>>, vector<1x128xf32>
      %44 = vector.broadcast %43 : vector<1x128xf32> to vector<32x128xf32>
      %45 = arith.mulf %42, %44 : vector<32x128xf32>
      %c0_29 = arith.constant 0 : index
      %c0_30 = arith.constant 0 : index
      %46 = vector.load %arg8[%c0_29, %c0_30] : memref<1x128xf32, #tpu.memory_space<vmem>>, vector<1x128xf32>
      %47 = vector.broadcast %46 : vector<1x128xf32> to vector<32x128xf32>
      %48 = arith.addf %45, %47 : vector<32x128xf32>
      %49 = arith.truncf %48 : vector<32x128xf32> to vector<32x128xbf16>
      %c0_31 = arith.constant 0 : index
      %c0_32 = arith.constant 0 : index
      %50 = vector.load %arg9[%c0_31, %c0_32] : memref<32x128xbf16, #tpu.memory_space<vmem>>, vector<32x128xbf16>
      tpu.vector_store %arg9[%c0_31, %c0_32], %49 {strides = array<i32>} : memref<32x128xbf16, #tpu.memory_space<vmem>>, vector<32x128xbf16>,
    } else {
    }
    return
  }
  func.func @transform_0(%arg0: i32, %arg1: i32) -> (i32, i32) {
    %c0_i32 = arith.constant 0 : i32
    %c0_i32_0 = arith.constant 0 : i32
    return %arg0, %c0_i32 : i32, i32
  }
  func.func @transform_1(%arg0: i32, %arg1: i32) -> (i32, i32) {
    %c0_i32 = arith.constant 0 : i32
    %c0_i32_0 = arith.constant 0 : i32
    return %c0_i32, %arg1 : i32, i32
  }
  func.func @transform_2(%arg0: i32, %arg1: i32) -> (i32, i32) {
    %c0_i32 = arith.constant 0 : i32
    %c0_i32_0 = arith.constant 0 : i32
    return %c0_i32, %arg1 : i32, i32
  }
  func.func @transform_3(%arg0: i32, %arg1: i32) -> (i32, i32) {
    %c0_i32 = arith.constant 0 : i32
    %c0_i32_0 = arith.constant 0 : i32
    return %arg1, %c0_i32 : i32, i32
  }
  func.func @transform_4(%arg0: i32, %arg1: i32) -> (i32, i32) {
    %c0_i32 = arith.constant 0 : i32
    %c0_i32_0 = arith.constant 0 : i32
    %c0_i32_1 = arith.constant 0 : i32
    return %c0_i32, %c0_i32_0 : i32, i32
  }
  func.func @transform_5(%arg0: i32, %arg1: i32) -> (i32, i32) {
    %c0_i32 = arith.constant 0 : i32
    %c0_i32_0 = arith.constant 0 : i32
    %c0_i32_1 = arith.constant 0 : i32
    return %c0_i32, %c0_i32_0 : i32, i32
  }
  func.func @transform_6(%arg0: i32, %arg1: i32) -> (i32, i32) {
    %c0_i32 = arith.constant 0 : i32
    %c0_i32_0 = arith.constant 0 : i32
    %c0_i32_1 = arith.constant 0 : i32
    return %c0_i32, %c0_i32_0 : i32, i32
  }
  func.func @transform_7(%arg0: i32, %arg1: i32) -> (i32, i32) {
    %c0_i32 = arith.constant 0 : i32
    %c0_i32_0 = arith.constant 0 : i32
    return %arg0, %c0_i32 : i32, i32
  }
}

module attributes {stable_mosaic.version = 11 : i64} {
  func.func @_linear_kernel(%arg0: i32, %arg1: memref<32x128xbf16, #tpu.memory_space<vmem>>, %arg2: memref<128x384xbf16, #tpu.memory_space<vmem>>, %arg3: memref<1x384xf32, #tpu.memory_space<vmem>>, %arg4: memref<32x384xbf16, #tpu.memory_space<vmem>>) attributes {dimension_semantics = [#tpu.dimension_semantics<parallel>], iteration_bounds = array<i64: 1>, scalar_prefetch = 0 : i64, scratch_operands = 0 : i64, tpu.core_type = #tpu.core_type<tc>, window_params = [{transform_indices = @transform_0, window_bounds = array<i64: 32, 128>}, {pipeline_mode = #tpu.pipeline_mode<synchronous>, transform_indices = @transform_1, window_bounds = array<i64: 128, 384>}, {pipeline_mode = #tpu.pipeline_mode<synchronous>, transform_indices = @transform_2, window_bounds = array<i64: 1, 384>}, {transform_indices = @transform_3, window_bounds = array<i64: 32, 384>}]} {
    %c0 = arith.constant 0 : index
    %c0_0 = arith.constant 0 : index
    %0 = vector.load %arg1[%c0, %c0_0] : memref<32x128xbf16, #tpu.memory_space<vmem>>, vector<32x128xbf16>
    %c0_1 = arith.constant 0 : index
    %c0_2 = arith.constant 0 : index
    %1 = vector.load %arg2[%c0_1, %c0_2] : memref<128x384xbf16, #tpu.memory_space<vmem>>, vector<128x384xbf16>
    %cst = arith.constant dense<0.000000e+00> : vector<32x384xf32>
    %2 = tpu.matmul %0, %1, %cst {dimension_numbers = #tpu.dot_dimension_numbers<[1], [0], [0], [1], [0, 0, 1, 1], [], []>} : vector<32x128xbf16>, vector<128x384xbf16>, vector<32x384xf32> -> vector<32x384xf32>
    %c0_3 = arith.constant 0 : index
    %c0_4 = arith.constant 0 : index
    %3 = vector.load %arg3[%c0_3, %c0_4] : memref<1x384xf32, #tpu.memory_space<vmem>>, vector<1x384xf32>
    %4 = vector.broadcast %3 : vector<1x384xf32> to vector<32x384xf32>
    %5 = arith.addf %2, %4 : vector<32x384xf32>
    %6 = arith.truncf %5 : vector<32x384xf32> to vector<32x384xbf16>
    %c0_5 = arith.constant 0 : index
    %c0_6 = arith.constant 0 : index
    %7 = vector.load %arg4[%c0_5, %c0_6] : memref<32x384xbf16, #tpu.memory_space<vmem>>, vector<32x384xbf16>
    tpu.vector_store %arg4[%c0_5, %c0_6], %6 {strides = array<i32>} : memref<32x384xbf16, #tpu.memory_space<vmem>>, vector<32x384xbf16>,
    return
  }
  func.func @transform_0(%arg0: i32) -> (i32, i32) {
    %c0_i32 = arith.constant 0 : i32
    %c0_i32_0 = arith.constant 0 : i32
    return %arg0, %c0_i32 : i32, i32
  }
  func.func @transform_1(%arg0: i32) -> (i32, i32) {
    %c0_i32 = arith.constant 0 : i32
    %c0_i32_0 = arith.constant 0 : i32
    %c0_i32_1 = arith.constant 0 : i32
    return %c0_i32, %c0_i32_0 : i32, i32
  }
  func.func @transform_2(%arg0: i32) -> (i32, i32) {
    %c0_i32 = arith.constant 0 : i32
    %c0_i32_0 = arith.constant 0 : i32
    %c0_i32_1 = arith.constant 0 : i32
    return %c0_i32, %c0_i32_0 : i32, i32
  }
  func.func @transform_3(%arg0: i32) -> (i32, i32) {
    %c0_i32 = arith.constant 0 : i32
    %c0_i32_0 = arith.constant 0 : i32
    return %arg0, %c0_i32 : i32, i32
  }
}

</mosaic_0001>

<llo_original>
// kernel: transformer_encoder.8
$region0: #{transformer_encoder.8}
  #allocation0 [shape = 'u32[]', space=smem, size = 0x4, offset = 0x4, fixed_abs, tag = 'smem constant byte address 0x4 - core index']
  #allocation1 [shape = 'u32[144,128]{1,0:T(1,128)}', space=vmem, size = 0x12000, scoped, tag = 'internal scratch']
  %s0 = inlined_call_operand.vmem [shape: bf16[32,128], index: 0, kind: input, shape index: {}]
  %s1 = inlined_call_operand.hbm [shape: bf16[128,384], index: 1, kind: input, shape index: {}]
  %s2 = inlined_call_operand.vmem [shape: f32[1,384], index: 2, kind: input, shape index: {}]
  %s3 = inlined_call_operand.vmem [shape: bf16[32,384], index: 3, kind: output, shape index: {}]
  %s4 = sld [smem:[#allocation0]]
  $region26: #{transformer_encoder.8} parent=0
    _
  %s6 = ssub.s32 1, %s4
  %s7 = scalar_select 0, %s6, %s4
  $region1: #{transformer_encoder.8} parent=0
    #allocation2 [shape = 'u8[98304]{0}', space=vmem, size = 0x18000, scoped, tag = 'input window, operand 1, single buffered']
    #allocation3 [shape = 's32[1]{0}', space=sflag, size = 0x4, scoped, tag = 'scoped memory for transformer_encoder.8']
    %8 = vsyncpa [#allocation3], 0
    // Predicated region
    $region2: #{transformer_encoder.8} parent=1 // pred_check
      _
    $region3: #{transformer_encoder.8} parent=1 // pred_check_branch
      %10 = sbr.rel (0) target = $region5
    $region4: #{transformer_encoder.8} parent=1 // pred_region
      _
    $region5: #{transformer_encoder.8} parent=1 // pred_fallthru
      _
    // Predicated region
    $region6: #{transformer_encoder.8} parent=1 // pred_check
      _
    $region7: #{transformer_encoder.8} parent=1 // pred_check_branch
      %12 = sbr.rel (0) target = $region9
    $region8: #{transformer_encoder.8} parent=1 // pred_region
      %s14 = ssub.s32 3072, 3072
      %15 = vsyncadd [#allocation3], %s14
      %s16 = sshll.u32 [#allocation2], 4
      %s17 = int_to_ptr.vmem [resolvable:$true] %s16
      %22 = dma.hbm_to_vmem [thread:$0]  %s1, 3072, %s17, [#allocation3], 192, 192, 12
    $region9: #{transformer_encoder.8} parent=1 // pred_fallthru
      _
    // Predicated region
    $region10: #{transformer_encoder.8} parent=1 // pred_check
      _
    $region11: #{transformer_encoder.8} parent=1 // pred_check_branch
      %24 = sbr.rel (0) target = $region13
    $region12: #{transformer_encoder.8} parent=1 // pred_region
      _
    $region13: #{transformer_encoder.8} parent=1 // pred_fallthru
      _
    // Predicated region
    $region14: #{transformer_encoder.8} parent=1 // pred_check
      _
    $region15: #{transformer_encoder.8} parent=1 // pred_check_branch
      %26 = sbr.rel (0) target = $region17
    $region16: #{transformer_encoder.8} parent=1 // pred_region
      %27 = dma.done [#allocation3], 3072
    $region17: #{transformer_encoder.8} parent=1 // pred_fallthru
      _
    %v29 = vld [vmem:[%s0] sm:$0xf]
    %v30 = vld [vmem:[%s0 + $0x4] sm:$0xf]
    %v31 = vld [vmem:[%s0 + $0x8] sm:$0xf]
    %v32 = vld [vmem:[%s0 + $0xc] sm:$0xf]
    %v33 = vld [vmem:[#allocation2] sm:$0xff]
    %v34 = vld [vmem:[#allocation2 + $0x8] sm:$0xf]
    %v35 = vld [vmem:[#allocation2 + $0xc] sm:$0xff]
    %v36 = vld [vmem:[#allocation2 + $0x14] sm:$0xf]
    %v37 = vld [vmem:[#allocation2 + $0x18] sm:$0xff]
    %v38 = vld [vmem:[#allocation2 + $0x20] sm:$0xf]
    %v39 = vld [vmem:[#allocation2 + $0x24] sm:$0xff]
    %v40 = vld [vmem:[#allocation2 + $0x2c] sm:$0xf]
    %v41 = vld [vmem:[#allocation2 + $0x30] sm:$0xff]
    %v42 = vld [vmem:[#allocation2 + $0x38] sm:$0xf]
    %v43 = vld [vmem:[#allocation2 + $0x3c] sm:$0xff]
    %v44 = vld [vmem:[#allocation2 + $0x44] sm:$0xf]
    %v45 = vld [vmem:[#allocation2 + $0x48] sm:$0xff]
    %v46 = vld [vmem:[#allocation2 + $0x50] sm:$0xf]
    %v47 = vld [vmem:[#allocation2 + $0x54] sm:$0xff]
    %v48 = vld [vmem:[#allocation2 + $0x5c] sm:$0xf]
    %v49 = vld [vmem:[#allocation2 + $0x60] sm:$0xff]
    %v50 = vld [vmem:[#allocation2 + $0x68] sm:$0xf]
    %v51 = vld [vmem:[#allocation2 + $0x6c] sm:$0xff]
    %v52 = vld [vmem:[#allocation2 + $0x74] sm:$0xf]
    %v53 = vld [vmem:[#allocation2 + $0x78] sm:$0xff]
    %v54 = vld [vmem:[#allocation2 + $0x80] sm:$0xf]
    %v55 = vld [vmem:[#allocation2 + $0x84] sm:$0xff]
    %v56 = vld [vmem:[#allocation2 + $0x8c] sm:$0xf]
    %v57 = vld [vmem:[#allocation2 + $0x90] sm:$0xff]
    %v58 = vld [vmem:[#allocation2 + $0x98] sm:$0xf]
    %v59 = vld [vmem:[#allocation2 + $0x9c] sm:$0xff]
    %v60 = vld [vmem:[#allocation2 + $0xa4] sm:$0xf]
    %v61 = vld [vmem:[#allocation2 + $0xa8] sm:$0xff]
    %v62 = vld [vmem:[#allocation2 + $0xb0] sm:$0xf]
    %v63 = vld [vmem:[#allocation2 + $0xb4] sm:$0xff]
    %v64 = vld [vmem:[#allocation2 + $0xbc] sm:$0xf]
    %v65 = vld [vmem:[%s2] sm:$0x7]
    %v67 = vlaneseq
    %v68 = vshrl.u32 %v67, 7
    %v69 = vsub.s32 0, %v68
    %v70 = vrot.slane %v65, %v69
    %v71 = vlaneseq
    %v72 = vshrl.u32 %v71, 7
    %v73 = vsub.s32 1, %v72
    %v74 = vrot.slane %v65, %v73
    %v75 = vlaneseq
    %v76 = vshrl.u32 %v75, 7
    %v77 = vsub.s32 2, %v76
    %v78 = vrot.slane %v65, %v77
    %v86 = vunpack.c.l.b16 %v29
    %v87 = vunpack.c.l.b16 %v30
    %v88 = vunpack.c.l.b16 %v31
    %v89 = vunpack.c.l.b16 %v32
    %v90 = vpack.c.b16 %v87, %v86
    %v91 = vpack.c.b16 %v89, %v88
    %v126 = vunpack.c.l.b16 %v33
    %v127 = vunpack.c.h.b16 %v33
    %v128 = vunpack.c.l.b16 %v34
    %v129 = vunpack.c.l.b16 %v35
    %v130 = vunpack.c.h.b16 %v35
    %v131 = vunpack.c.l.b16 %v36
    %v132 = vunpack.c.l.b16 %v37
    %v133 = vunpack.c.h.b16 %v37
    %v134 = vunpack.c.l.b16 %v38
    %v135 = vunpack.c.l.b16 %v39
    %v136 = vunpack.c.h.b16 %v39
    %v137 = vunpack.c.l.b16 %v40
    %v138 = vunpack.c.l.b16 %v41
    %v139 = vunpack.c.h.b16 %v41
    %v140 = vunpack.c.l.b16 %v42
    %v141 = vunpack.c.l.b16 %v43
    %v142 = vunpack.c.h.b16 %v43
    %v143 = vunpack.c.l.b16 %v44
    %v144 = vunpack.c.l.b16 %v45
    %v145 = vunpack.c.h.b16 %v45
    %v146 = vunpack.c.l.b16 %v46
    %v147 = vunpack.c.l.b16 %v47
    %v148 = vunpack.c.h.b16 %v47
    %v149 = vunpack.c.l.b16 %v48
    %v150 = vunpack.c.l.b16 %v49
    %v151 = vunpack.c.h.b16 %v49
    %v152 = vunpack.c.l.b16 %v50
    %v153 = vunpack.c.l.b16 %v51
    %v154 = vunpack.c.h.b16 %v51
    %v155 = vunpack.c.l.b16 %v52
    %v156 = vunpack.c.l.b16 %v53
    %v157 = vunpack.c.h.b16 %v53
    %v158 = vunpack.c.l.b16 %v54
    %v159 = vunpack.c.l.b16 %v55
    %v160 = vunpack.c.h.b16 %v55
    %v161 = vunpack.c.l.b16 %v56
    %v162 = vunpack.c.l.b16 %v57
    %v163 = vunpack.c.h.b16 %v57
    %v164 = vunpack.c.l.b16 %v58
    %v165 = vunpack.c.l.b16 %v59
    %v166 = vunpack.c.h.b16 %v59
    %v167 = vunpack.c.l.b16 %v60
    %v168 = vunpack.c.l.b16 %v61
    %v169 = vunpack.c.h.b16 %v61
    %v170 = vunpack.c.l.b16 %v62
    %v171 = vunpack.c.l.b16 %v63
    %v172 = vunpack.c.h.b16 %v63
    %v173 = vunpack.c.l.b16 %v64
    %v174 = vpack.c.b16 %v129, %v126
    %v175 = vpack.c.b16 %v130, %v127
    %v176 = vpack.c.b16 %v131, %v128
    %v177 = vpack.c.b16 %v135, %v132
    %v178 = vpack.c.b16 %v136, %v133
    %v179 = vpack.c.b16 %v137, %v134
    %v180 = vpack.c.b16 %v141, %v138
    %v181 = vpack.c.b16 %v142, %v139
    %v182 = vpack.c.b16 %v143, %v140
    %v183 = vpack.c.b16 %v147, %v144
    %v184 = vpack.c.b16 %v148, %v145
    %v185 = vpack.c.b16 %v149, %v146
    %v186 = vpack.c.b16 %v153, %v150
    %v187 = vpack.c.b16 %v154, %v151
    %v188 = vpack.c.b16 %v155, %v152
    %v189 = vpack.c.b16 %v159, %v156
    %v190 = vpack.c.b16 %v160, %v157
    %v191 = vpack.c.b16 %v161, %v158
    %v192 = vpack.c.b16 %v165, %v162
    %v193 = vpack.c.b16 %v166, %v163
    %v194 = vpack.c.b16 %v167, %v164
    %v195 = vpack.c.b16 %v171, %v168
    %v196 = vpack.c.b16 %v172, %v169
    %v197 = vpack.c.b16 %v173, %v170
    %222 = vmatprep.subr.bf16.mxu0 %v175
    %223 = vmatpush1.bf16.msra.mxu0 %v174
    %224 = vmatprep.subr.bf16.mxu0 %v178
    %225 = vmatpush1.bf16.msra.mxu0 %v177
    %226 = vmatprep.subr.bf16.mxu0 %v181
    %227 = vmatpush1.bf16.msra.mxu0 %v180
    %228 = vmatprep.subr.bf16.mxu0 %v184
    %229 = vmatpush1.bf16.msra.mxu0 %v183
    %230 = vmatprep.subr.bf16.mxu0 %v187
    %231 = vmatpush1.bf16.msra.mxu0 %v186
    %232 = vmatprep.subr.bf16.mxu0 %v190
    %233 = vmatpush1.bf16.msra.mxu0 %v189
    %234 = vmatprep.subr.bf16.mxu0 %v193
    %235 = vmatpush1.bf16.msra.mxu0 %v192
    %236 = vmatprep.subr.bf16.mxu0 %v196
    %237 = vmatpush1.bf16.msra.mxu0 %v195
    %238 = vmatprep.subr.bf16.mxu0 0
    %239 = vmatpush1.bf16.msra.mxu0 0
    %240 = vmatprep.subr.bf16.mxu0 0
    %241 = vmatpush1.bf16.msra.mxu0 0
    %242 = vmatprep.subr.bf16.mxu0 0
    %243 = vmatpush1.bf16.msra.mxu0 0
    %244 = vmatprep.subr.bf16.mxu0 0
    %245 = vmatpush1.bf16.msra.mxu0 0
    %246 = vmatprep.subr.bf16.mxu0 0
    %247 = vmatpush1.bf16.msra.mxu0 0
    %248 = vmatprep.subr.bf16.mxu0 0
    %249 = vmatpush1.bf16.msra.mxu0 0
    %250 = vmatprep.subr.bf16.mxu0 0
    %251 = vmatpush1.bf16.msra.mxu0 0
    %252 = vmatprep.subr.bf16.mxu0 0
    %253 = vmatpush1.bf16.msra.mxu0 0
    %254 = vmatprep.mubr.bf16.mxu0 0
    %255 = vmatmul.mubr.bf16.gmra.mrb[0].mxu0 %v90
    %v256 = vpop.f32.mrb[0].mxu0
    %v257 = vadd.f32 %v70, %v256
    %v258 = vpop.f32.mrb[0].mxu0
    %v259 = vadd.f32 %v74, %v258
    %v260 = vpop.f32.mrb[0].mxu0
    %v261 = vadd.f32 %v70, %v260
    %v262 = vpop.f32.mrb[0].mxu0
    %v263 = vadd.f32 %v74, %v262
    %264 = vmatprep.mubr.bf16.mxu0 0
    %265 = vmatmul.mubr.bf16.gmra.mrb[0].mxu0 %v91
    %v266 = vpop.f32.mrb[0].mxu0
    %v267 = vadd.f32 %v70, %v266
    %v268 = vpop.f32.mrb[0].mxu0
    %v269 = vadd.f32 %v74, %v268
    %v270 = vpop.f32.mrb[0].mxu0
    %v271 = vadd.f32 %v70, %v270
    %v272 = vpop.f32.mrb[0].mxu0
    %v273 = vadd.f32 %v74, %v272
    %274 = vdwg.mxu0
    %275 = vmatprep.subr.bf16.mxu0 0
    %276 = vmatpush1.bf16.msra.mxu0 %v176
    %277 = vmatprep.subr.bf16.mxu0 0
    %278 = vmatpush1.bf16.msra.mxu0 %v179
    %279 = vmatprep.subr.bf16.mxu0 0
    %280 = vmatpush1.bf16.msra.mxu0 %v182
    %281 = vmatprep.subr.bf16.mxu0 0
    %282 = vmatpush1.bf16.msra.mxu0 %v185
    %283 = vmatprep.subr.bf16.mxu0 0
    %284 = vmatpush1.bf16.msra.mxu0 %v188
    %285 = vmatprep.subr.bf16.mxu0 0
    %286 = vmatpush1.bf16.msra.mxu0 %v191
    %287 = vmatprep.subr.bf16.mxu0 0
    %288 = vmatpush1.bf16.msra.mxu0 %v194
    %289 = vmatprep.subr.bf16.mxu0 0
    %290 = vmatpush1.bf16.msra.mxu0 %v197
    %291 = vmatprep.subr.bf16.mxu0 0
    %292 = vmatpush1.bf16.msra.mxu0 0
    %293 = vmatprep.subr.bf16.mxu0 0
    %294 = vmatpush1.bf16.msra.mxu0 0
    %295 = vmatprep.subr.bf16.mxu0 0
    %296 = vmatpush1.bf16.msra.mxu0 0
    %297 = vmatprep.subr.bf16.mxu0 0
    %298 = vmatpush1.bf16.msra.mxu0 0
    %299 = vmatprep.subr.bf16.mxu0 0
    %300 = vmatpush1.bf16.msra.mxu0 0
    %301 = vmatprep.subr.bf16.mxu0 0
    %302 = vmatpush1.bf16.msra.mxu0 0
    %303 = vmatprep.subr.bf16.mxu0 0
    %304 = vmatpush1.bf16.msra.mxu0 0
    %305 = vmatprep.subr.bf16.mxu0 0
    %306 = vmatpush1.bf16.msra.mxu0 0
    %307 = vmatprep.mubr.bf16.mxu0 0
    %308 = vmatmul.mubr.bf16.gmra.mrb[0].mxu0 %v90
    %v309 = vpop.f32.mrb[0].mxu0
    %v310 = vadd.f32 %v78, %v309
    %v311 = vpop.f32.mrb[0].mxu0
    %v312 = vpop.f32.mrb[0].mxu0
    %v313 = vadd.f32 %v78, %v312
    %v314 = vpop.f32.mrb[0].mxu0
    %315 = vmatprep.mubr.bf16.mxu0 0
    %316 = vmatmul.mubr.bf16.gmra.mrb[0].mxu0 %v91
    %v317 = vpop.f32.mrb[0].mxu0
    %v318 = vadd.f32 %v78, %v317
    %v319 = vpop.f32.mrb[0].mxu0
    %v320 = vpop.f32.mrb[0].mxu0
    %v321 = vadd.f32 %v78, %v320
    %v322 = vpop.f32.mrb[0].mxu0
    %323 = vdwg.mxu0
    %v324 = vpack.c.bf16 %v261, %v257
    %v325 = vpack.c.bf16 %v263, %v259
    %v326 = vpack.c.bf16 %v313, %v310
    %v327 = vpack.c.bf16 %v271, %v267
    %v328 = vpack.c.bf16 %v273, %v269
    %v329 = vpack.c.bf16 %v321, %v318
    %v336 = vunpack.c.l.b16 %v324
    %v337 = vunpack.c.l.b16 %v325
    %v338 = vunpack.c.l.b16 %v326
    %v339 = vunpack.c.h.b16 %v324
    %v340 = vunpack.c.h.b16 %v325
    %v341 = vunpack.c.h.b16 %v326
    %v342 = vunpack.c.l.b16 %v327
    %v343 = vunpack.c.l.b16 %v328
    %v344 = vunpack.c.l.b16 %v329
    %v345 = vunpack.c.h.b16 %v327
    %v346 = vunpack.c.h.b16 %v328
    %v347 = vunpack.c.h.b16 %v329
    %v348 = vpack.c.b16 %v337, %v336
    %v349 = vpack.c.b16 %v338, %v338
    %v350 = vpack.c.b16 %v340, %v339
    %v351 = vpack.c.b16 %v341, %v341
    %v352 = vpack.c.b16 %v343, %v342
    %v353 = vpack.c.b16 %v344, %v344
    %v354 = vpack.c.b16 %v346, %v345
    %v355 = vpack.c.b16 %v347, %v347
    %364 = vst [vmem:[%s3] sm:$0xff] %v348
    %365 = vst [vmem:[%s3 + $0x8] sm:$0xf] %v349
    %366 = vst [vmem:[%s3 + $0xc] sm:$0xff] %v350
    %367 = vst [vmem:[%s3 + $0x14] sm:$0xf] %v351
    %368 = vst [vmem:[%s3 + $0x18] sm:$0xff] %v352
    %369 = vst [vmem:[%s3 + $0x20] sm:$0xf] %v353
    %370 = vst [vmem:[%s3 + $0x24] sm:$0xff] %v354
    %371 = vst [vmem:[%s3 + $0x2c] sm:$0xf] %v355
    // Predicated region
    $region18: #{transformer_encoder.8} parent=1 // pred_check
      _
    $region19: #{transformer_encoder.8} parent=1 // pred_check_branch
      %373 = sbr.rel (0) target = $region21
    $region20: #{transformer_encoder.8} parent=1 // pred_region
      _
    $region21: #{transformer_encoder.8} parent=1 // pred_fallthru
      _
    // Predicated region
    $region22: #{transformer_encoder.8} parent=1 // pred_check
      _
    $region23: #{transformer_encoder.8} parent=1 // pred_check_branch
      %375 = sbr.rel (0) target = $region25
    $region24: #{transformer_encoder.8} parent=1 // pred_region
      _
    $region25: #{transformer_encoder.8} parent=1 // pred_fallthru
      _
    %376 = vsyncpa [#allocation3], 1

// kernel: transformer_encoder.10
$region0: #{transformer_encoder.10}
  #allocation0 [shape = 'u32[]', space=smem, size = 0x4, offset = 0x4, fixed_abs, tag = 'smem constant byte address 0x4 - core index']
  #allocation1 [shape = 'u32[144,128]{1,0:T(1,128)}', space=vmem, size = 0x12000, scoped, tag = 'internal scratch']
  %s0 = inlined_call_operand.vmem [shape: bf16[32,128], index: 0, kind: input, shape index: {}]
  %s1 = inlined_call_operand.vmem [shape: bf16[128,128], index: 1, kind: input, shape index: {}]
  %s2 = inlined_call_operand.vmem [shape: f32[1,128], index: 2, kind: input, shape index: {}]
  %s3 = inlined_call_operand.vmem [shape: bf16[32,128], index: 3, kind: input, shape index: {}]
  %s4 = inlined_call_operand.vmem [shape: f32[1,128], index: 4, kind: input, shape index: {}]
  %s5 = inlined_call_operand.vmem [shape: f32[1,128], index: 5, kind: input, shape index: {}]
  %s6 = inlined_call_operand.vmem [shape: bf16[32,128], index: 6, kind: output, shape index: {}]
  %s7 = sld [smem:[#allocation0]]
  $region34: #{transformer_encoder.10} parent=0
    _
  %s9 = ssub.s32 1, %s7
  %s10 = scalar_select 0, %s9, %s7
  // Predicated region
  $region2: #{transformer_encoder.10} parent=0 // pred_check
    _
  $region3: #{transformer_encoder.10} parent=0 // pred_check_branch
    %12 = sbr.rel (0) target = $region5
  $region4: #{transformer_encoder.10} parent=0 // pred_region
    _
  $region5: #{transformer_encoder.10} parent=0 // pred_fallthru
    _
  // Predicated region
  $region6: #{transformer_encoder.10} parent=0 // pred_check
    _
  $region7: #{transformer_encoder.10} parent=0 // pred_check_branch
    %14 = sbr.rel (0) target = $region9
  $region8: #{transformer_encoder.10} parent=0 // pred_region
    _
  $region9: #{transformer_encoder.10} parent=0 // pred_fallthru
    _
  // Predicated region
  $region10: #{transformer_encoder.10} parent=0 // pred_check
    _
  $region11: #{transformer_encoder.10} parent=0 // pred_check_branch
    %16 = sbr.rel (0) target = $region13
  $region12: #{transformer_encoder.10} parent=0 // pred_region
    _
  $region13: #{transformer_encoder.10} parent=0 // pred_fallthru
    _
  // Predicated region
  $region14: #{transformer_encoder.10} parent=0 // pred_check
    _
  $region15: #{transformer_encoder.10} parent=0 // pred_check_branch
    %18 = sbr.rel (0) target = $region17
  $region16: #{transformer_encoder.10} parent=0 // pred_region
    _
  $region17: #{transformer_encoder.10} parent=0 // pred_fallthru
    _
  // Predicated region
  $region18: #{transformer_encoder.10} parent=0 // pred_check
    _
  $region19: #{transformer_encoder.10} parent=0 // pred_check_branch
    %20 = sbr.rel (0) target = $region21
  $region20: #{transformer_encoder.10} parent=0 // pred_region
    _
  $region21: #{transformer_encoder.10} parent=0 // pred_fallthru
    _
  // Predicated region
  $region22: #{transformer_encoder.10} parent=0 // pred_check
    _
  $region23: #{transformer_encoder.10} parent=0 // pred_check_branch
    %22 = sbr.rel (0) target = $region25
  $region24: #{transformer_encoder.10} parent=0 // pred_region
    _
  $region25: #{transformer_encoder.10} parent=0 // pred_fallthru
    _
  %v24 = vld [vmem:[%s0] sm:$0xf]
  %v25 = vld [vmem:[%s0 + $0x4] sm:$0xf]
  %v26 = vld [vmem:[%s0 + $0x8] sm:$0xf]
  %v27 = vld [vmem:[%s0 + $0xc] sm:$0xf]
  %v28 = vld [vmem:[%s1] sm:$0xf]
  %v29 = vld [vmem:[%s1 + $0x4] sm:$0xf]
  %v30 = vld [vmem:[%s1 + $0x8] sm:$0xf]
  %v31 = vld [vmem:[%s1 + $0xc] sm:$0xf]
  %v32 = vld [vmem:[%s1 + $0x10] sm:$0xf]
  %v33 = vld [vmem:[%s1 + $0x14] sm:$0xf]
  %v34 = vld [vmem:[%s1 + $0x18] sm:$0xf]
  %v35 = vld [vmem:[%s1 + $0x1c] sm:$0xf]
  %v36 = vld [vmem:[%s1 + $0x20] sm:$0xf]
  %v37 = vld [vmem:[%s1 + $0x24] sm:$0xf]
  %v38 = vld [vmem:[%s1 + $0x28] sm:$0xf]
  %v39 = vld [vmem:[%s1 + $0x2c] sm:$0xf]
  %v40 = vld [vmem:[%s1 + $0x30] sm:$0xf]
  %v41 = vld [vmem:[%s1 + $0x34] sm:$0xf]
  %v42 = vld [vmem:[%s1 + $0x38] sm:$0xf]
  %v43 = vld [vmem:[%s1 + $0x3c] sm:$0xf]
  %v44 = vld [vmem:[%s2] sm:$0x1]
  %v46 = vlaneseq
  %v47 = vshrl.u32 %v46, 7
  %v48 = vsub.s32 0, %v47
  %v49 = vrot.slane %v44, %v48
  %v55 = vunpack.c.l.b16 %v24
  %v56 = vunpack.c.l.b16 %v25
  %v57 = vunpack.c.l.b16 %v26
  %v58 = vunpack.c.l.b16 %v27
  %v59 = vpack.c.b16 %v56, %v55
  %v60 = vpack.c.b16 %v58, %v57
  %v79 = vunpack.c.l.b16 %v28
  %v80 = vunpack.c.l.b16 %v29
  %v81 = vunpack.c.l.b16 %v30
  %v82 = vunpack.c.l.b16 %v31
  %v83 = vunpack.c.l.b16 %v32
  %v84 = vunpack.c.l.b16 %v33
  %v85 = vunpack.c.l.b16 %v34
  %v86 = vunpack.c.l.b16 %v35
  %v87 = vunpack.c.l.b16 %v36
  %v88 = vunpack.c.l.b16 %v37
  %v89 = vunpack.c.l.b16 %v38
  %v90 = vunpack.c.l.b16 %v39
  %v91 = vunpack.c.l.b16 %v40
  %v92 = vunpack.c.l.b16 %v41
  %v93 = vunpack.c.l.b16 %v42
  %v94 = vunpack.c.l.b16 %v43
  %v95 = vpack.c.b16 %v80, %v79
  %v96 = vpack.c.b16 %v82, %v81
  %v97 = vpack.c.b16 %v84, %v83
  %v98 = vpack.c.b16 %v86, %v85
  %v99 = vpack.c.b16 %v88, %v87
  %v100 = vpack.c.b16 %v90, %v89
  %v101 = vpack.c.b16 %v92, %v91
  %v102 = vpack.c.b16 %v94, %v93
  %111 = vmatprep.subr.bf16.mxu0 0
  %112 = vmatpush1.bf16.msra.mxu0 %v95
  %113 = vmatprep.subr.bf16.mxu0 0
  %114 = vmatpush1.bf16.msra.mxu0 %v96
  %115 = vmatprep.subr.bf16.mxu0 0
  %116 = vmatpush1.bf16.msra.mxu0 %v97
  %117 = vmatprep.subr.bf16.mxu0 0
  %118 = vmatpush1.bf16.msra.mxu0 %v98
  %119 = vmatprep.subr.bf16.mxu0 0
  %120 = vmatpush1.bf16.msra.mxu0 %v99
  %121 = vmatprep.subr.bf16.mxu0 0
  %122 = vmatpush1.bf16.msra.mxu0 %v100
  %123 = vmatprep.subr.bf16.mxu0 0
  %124 = vmatpush1.bf16.msra.mxu0 %v101
  %125 = vmatprep.subr.bf16.mxu0 0
  %126 = vmatpush1.bf16.msra.mxu0 %v102
  %127 = vmatprep.subr.bf16.mxu0 0
  %128 = vmatpush1.bf16.msra.mxu0 0
  %129 = vmatprep.subr.bf16.mxu0 0
  %130 = vmatpush1.bf16.msra.mxu0 0
  %131 = vmatprep.subr.bf16.mxu0 0
  %132 = vmatpush1.bf16.msra.mxu0 0
  %133 = vmatprep.subr.bf16.mxu0 0
  %134 = vmatpush1.bf16.msra.mxu0 0
  %135 = vmatprep.subr.bf16.mxu0 0
  %136 = vmatpush1.bf16.msra.mxu0 0
  %137 = vmatprep.subr.bf16.mxu0 0
  %138 = vmatpush1.bf16.msra.mxu0 0
  %139 = vmatprep.subr.bf16.mxu0 0
  %140 = vmatpush1.bf16.msra.mxu0 0
  %141 = vmatprep.subr.bf16.mxu0 0
  %142 = vmatpush1.bf16.msra.mxu0 0
  %143 = vmatprep.mubr.bf16.mxu0 0
  %144 = vmatmul.mubr.bf16.gmra.mrb[0].mxu0 %v59
  %v145 = vpop.f32.mrb[0].mxu0
  %v146 = vadd.f32 %v49, %v145
  %v147 = vpop.f32.mrb[0].mxu0
  %v148 = vpop.f32.mrb[0].mxu0
  %v149 = vadd.f32 %v49, %v148
  %v150 = vpop.f32.mrb[0].mxu0
  %151 = vmatprep.mubr.bf16.mxu0 0
  %152 = vmatmul.mubr.bf16.gmra.mrb[0].mxu0 %v60
  %v153 = vpop.f32.mrb[0].mxu0
  %v154 = vadd.f32 %v49, %v153
  %v155 = vpop.f32.mrb[0].mxu0
  %v156 = vpop.f32.mrb[0].mxu0
  %v157 = vadd.f32 %v49, %v156
  %v158 = vpop.f32.mrb[0].mxu0
  %159 = vdwg.mxu0
  %v160 = vld [vmem:[%s3] sm:$0xf]
  %v161 = vld [vmem:[%s3 + $0x4] sm:$0xf]
  %v162 = vld [vmem:[%s3 + $0x8] sm:$0xf]
  %v163 = vld [vmem:[%s3 + $0xc] sm:$0xf]
  %v164 = vunpack.c.l.bf16 %v160
  %v165 = vunpack.c.l.bf16 %v161
  %v166 = vunpack.c.l.bf16 %v162
  %v167 = vunpack.c.l.bf16 %v163
  %v168 = vadd.f32 %v146, %v164
  %v169 = vadd.f32 %v149, %v165
  %v170 = vadd.f32 %v154, %v166
  %v171 = vadd.f32 %v157, %v167
  %172 = vadd.xlane.f32.xlu0 %v168
  %v173 = vpop.xlane.xlu0 %172
  %174 = vadd.xlane.f32.xlu0 %v169
  %v175 = vpop.xlane.xlu0 %174
  %176 = vadd.xlane.f32.xlu0 %v170
  %v177 = vpop.xlane.xlu0 %176
  %178 = vadd.xlane.f32.xlu0 %v171
  %v179 = vpop.xlane.xlu0 %178
  %v180 = vrcp.pop 128.0
  %v181 = vmul.f32 %v173, %v180
  %v182 = vmul.f32 %v175, %v180
  %v183 = vmul.f32 %v177, %v180
  %v184 = vmul.f32 %v179, %v180
  %v185 = vsub.f32 %v168, %v181
  %v186 = vsub.f32 %v169, %v182
  %v187 = vsub.f32 %v170, %v183
  %v188 = vsub.f32 %v171, %v184
  %v189 = vmul.f32 %v185, %v185
  %v190 = vmul.f32 %v186, %v186
  %v191 = vmul.f32 %v187, %v187
  %v192 = vmul.f32 %v188, %v188
  %193 = vadd.xlane.f32.xlu0 %v189
  %v194 = vpop.xlane.xlu0 %193
  %195 = vadd.xlane.f32.xlu0 %v190
  %v196 = vpop.xlane.xlu0 %195
  %197 = vadd.xlane.f32.xlu0 %v191
  %v198 = vpop.xlane.xlu0 %197
  %199 = vadd.xlane.f32.xlu0 %v192
  %v200 = vpop.xlane.xlu0 %199
  %v201 = vmul.f32 %v194, %v180
  %v202 = vmul.f32 %v196, %v180
  %v203 = vmul.f32 %v198, %v180
  %v204 = vmul.f32 %v200, %v180
  %v205 = vadd.f32 %v201, 1e-05
  %v206 = vadd.f32 %v202, 1e-05
  %v207 = vadd.f32 %v203, 1e-05
  %v208 = vadd.f32 %v204, 1e-05
  %v209 = vrsqrt.pop %v205
  %v210 = vrsqrt.pop %v206
  %v211 = vrsqrt.pop %v207
  %v212 = vrsqrt.pop %v208
  %v213 = vmul.f32 %v185, %v209
  %v214 = vmul.f32 %v186, %v210
  %v215 = vmul.f32 %v187, %v211
  %v216 = vmul.f32 %v188, %v212
  %v217 = vld [vmem:[%s4] sm:$0x1]
  %v219 = vlaneseq
  %v220 = vshrl.u32 %v219, 7
  %v221 = vsub.s32 0, %v220
  %v222 = vrot.slane %v217, %v221
  %v224 = vmul.f32 %v213, %v222
  %v225 = vmul.f32 %v214, %v222
  %v226 = vmul.f32 %v215, %v222
  %v227 = vmul.f32 %v216, %v222
  %v228 = vld [vmem:[%s5] sm:$0x1]
  %v230 = vlaneseq
  %v231 = vshrl.u32 %v230, 7
  %v232 = vsub.s32 0, %v231
  %v233 = vrot.slane %v228, %v232
  %v235 = vadd.f32 %v224, %v233
  %v236 = vadd.f32 %v225, %v233
  %v237 = vadd.f32 %v226, %v233
  %v238 = vadd.f32 %v227, %v233
  %v239 = vpack.c.bf16 %v236, %v235
  %v240 = vpack.c.bf16 %v238, %v237
  %v243 = vunpack.c.l.b16 %v239
  %v244 = vunpack.c.h.b16 %v239
  %v245 = vunpack.c.l.b16 %v240
  %v246 = vunpack.c.h.b16 %v240
  %v247 = vpack.c.b16 %v243, %v243
  %v248 = vpack.c.b16 %v244, %v244
  %v249 = vpack.c.b16 %v245, %v245
  %v250 = vpack.c.b16 %v246, %v246
  %255 = vst [vmem:[%s6] sm:$0xf] %v247
  %256 = vst [vmem:[%s6 + $0x4] sm:$0xf] %v248
  %257 = vst [vmem:[%s6 + $0x8] sm:$0xf] %v249
  %258 = vst [vmem:[%s6 + $0xc] sm:$0xf] %v250
  // Predicated region
  $region26: #{transformer_encoder.10} parent=0 // pred_check
    _
  $region27: #{transformer_encoder.10} parent=0 // pred_check_branch
    %260 = sbr.rel (0) target = $region29
  $region28: #{transformer_encoder.10} parent=0 // pred_region
    _
  $region29: #{transformer_encoder.10} parent=0 // pred_fallthru
    _
  // Predicated region
  $region30: #{transformer_encoder.10} parent=0 // pred_check
    _
  $region31: #{transformer_encoder.10} parent=0 // pred_check_branch
    %262 = sbr.rel (0) target = $region33
  $region32: #{transformer_encoder.10} parent=0 // pred_region
    _
  $region33: #{transformer_encoder.10} parent=0 // pred_fallthru
    _

// kernel: transformer_encoder.9
$region0: #{transformer_encoder.9}
  #allocation0 [shape = 'u32[]', space=smem, size = 0x4, offset = 0x4, fixed_abs, tag = 'smem constant byte address 0x4 - core index']
  #allocation1 [shape = 'u32[144,128]{1,0:T(1,128)}', space=vmem, size = 0x12000, scoped, tag = 'internal scratch']
  %s0 = inlined_call_operand.vmem [shape: bf16[2,16,384], index: 0, kind: input, shape index: {}]
  %s1 = inlined_call_operand.vmem [shape: bf16[2,16,128], index: 1, kind: output, shape index: {}]
  %s2 = sld [smem:[#allocation0]]
  $region37: #{transformer_encoder.9} parent=0
    _
  %s4 = ssub.s32 1, %s2
  %s5 = scalar_select 0, %s4, %s2
  loop: start=0, step=1, limit=4
  $region2: #{transformer_encoder.9} parent=0 // loop_pre_header
    _
  $region3: #{transformer_encoder.9} parent=0 // loop_header
    %s7 = sphi 0, %s11
    %p8 = scmp.ge.s32.totalorder %s7, 4
    %s17 = sphi 0, %s19
    %s20 = sphi 0, %s17
    %s21 = sphi 0, %s20
    %s37 = sphi 0, %s21
    %s43 = sphi 0, %s45
    %s46 = sphi 0, %s43
    %s47 = sphi 0, %s46
    %s63 = sphi 0, %s47
  $region4: #{transformer_encoder.9} parent=0 // loop_header_branch
    %10 = sbr.rel (%p8) target = $region8
  $region5: #{transformer_encoder.9} parent=0 // loop_body
    %s12 = ssub.s32 %s7, 1
    %s13 = ssub.s32 %s7, 2
    %s14 = sadd.s32 %s7, 1
    %s15 = ssub.s32 %s7, %s14
    %p16 = scmp.eq.s32.totalorder %s15, 0
    %s18 = sadd.s32 %s17, 1
    %s19 = scalar_select %p16, %s17, %s18
    %p22 = pneg %p16
    %p23 = scmp.eq.s32.totalorder %s7, 1
    %p24 = por %p22, %p23
    %p25 = scmp.ne.s32.totalorder %s17, %s20
    %p26 = scmp.eq.s32.totalorder %s7, 0
    %p27 = por %p25, %p26
    %p28 = scmp.ne.s32.totalorder %s17, %s20
    %p29 = scmp.eq.s32.totalorder %s12, 1
    %p30 = por %p28, %p29
    %p31 = scmp.ne.s32.totalorder %s20, %s21
    %p32 = scmp.eq.s32.totalorder %s12, 0
    %p33 = por %p31, %p32
    %p34 = scmp.ne.s32.totalorder %s20, %s21
    %p35 = scmp.eq.s32.totalorder %s13, 1
    %p36 = por %p34, %p35
    %p38 = scmp.ne.s32.totalorder %s21, %s37
    %p39 = scmp.eq.s32.totalorder %s13, 0
    %p40 = por %p38, %p39
    %s41 = ssub.s32 %s7, %s14
    %p42 = scmp.eq.s32.totalorder %s41, 0
    %s44 = sadd.s32 %s43, 1
    %s45 = scalar_select %p42, %s43, %s44
    %p48 = pneg %p42
    %p49 = scmp.eq.s32.totalorder %s7, 1
    %p50 = por %p48, %p49
    %p51 = scmp.ne.s32.totalorder %s43, %s46
    %p52 = scmp.eq.s32.totalorder %s7, 0
    %p53 = por %p51, %p52
    %p54 = scmp.ne.s32.totalorder %s43, %s46
    %p55 = scmp.eq.s32.totalorder %s12, 1
    %p56 = por %p54, %p55
    %p57 = scmp.ne.s32.totalorder %s46, %s47
    %p58 = scmp.eq.s32.totalorder %s12, 0
    %p59 = por %p57, %p58
    %p60 = scmp.ne.s32.totalorder %s46, %s47
    %p61 = scmp.eq.s32.totalorder %s13, 1
    %p62 = por %p60, %p61
    %p64 = scmp.ne.s32.totalorder %s47, %s63
    %p65 = scmp.eq.s32.totalorder %s13, 0
    %p66 = por %p64, %p65
    %p67 = scmp.le.s32.totalorder 1, %s7
    %p68 = scmp.lt.s32.totalorder %s7, 3
    %p69 = pnand %p67, %p68
    %p70 = pneg %p69
    // Predicated region
    $region9: #{transformer_encoder.9} parent=5 // pred_check
      _
    $region10: #{transformer_encoder.9} parent=5 // pred_check_branch
      %72 = sbr.rel (%p69) target = $region12
    $region11: #{transformer_encoder.9} parent=5 // pred_region
      %s73 = ssub.s32 %s7, 1
    $region12: #{transformer_encoder.9} parent=5 // pred_fallthru
      _
    %p74 = scmp.lt.s32.totalorder %s7, 2
    // Predicated region
    $region13: #{transformer_encoder.9} parent=5 // pred_check
      %p75 = pneg %p74
    $region14: #{transformer_encoder.9} parent=5 // pred_check_branch
      %77 = sbr.rel (%p75) target = $region16
    $region15: #{transformer_encoder.9} parent=5 // pred_region
      // Predicated region
      $region17: #{transformer_encoder.9} parent=15 // pred_check
        %p78 = pneg %p27
      $region18: #{transformer_encoder.9} parent=15 // pred_check_branch
        %80 = sbr.rel (%p78) target = $region20
      $region19: #{transformer_encoder.9} parent=15 // pred_region
        %p81 = scmp.lt.s32.totalorder %s7, 1
        %s82 = scalar_select %p81, %s7, 1
        %s83 = smul.addr %s82, 6
        %s84 = smul.addr %s83, 4
        %s85 = scalar_lea.vmem %s0, %s84
      $region20: #{transformer_encoder.9} parent=15 // pred_fallthru
        _
    $region16: #{transformer_encoder.9} parent=5 // pred_fallthru
      _
    %p86 = scmp.le.s32.totalorder 1, %s7
    %p87 = scmp.lt.s32.totalorder %s7, 3
    %p88 = pnand %p86, %p87
    %p89 = pneg %p88
    // Predicated region
    $region21: #{transformer_encoder.9} parent=5 // pred_check
      _
    $region22: #{transformer_encoder.9} parent=5 // pred_check_branch
      %91 = sbr.rel (%p88) target = $region24
    $region23: #{transformer_encoder.9} parent=5 // pred_region
      %s92 = ssub.s32 %s7, 1
      %p93 = scmp.lt.s32.totalorder %s12, 1
      %s94 = scalar_select %p93, %s12, 1
      %s95 = smul.addr %s94, 6
      %s96 = smul.addr %s95, 4
      %s97 = scalar_lea.vmem %s0, %s96
      %p98 = pneg %p33
      %p99 = pneg %p30
      %p100 = pneg %p59
      %p101 = pneg %p56
      %p102 = scmp.lt.s32.totalorder %s12, 1
      %s103 = scalar_select %p102, %s12, 1
      %s104 = smul.addr %s103, 2
      %s105 = smul.addr %s104, 4
      %s106 = scalar_lea.vmem %s1, %s105
      %p107 = scmp.lt.s32.totalorder %s12, 1
      %s108 = scalar_select %p107, %s12, 1
      %s109 = smul.addr %s108, 6
      %s110 = smul.addr %s109, 4
      %s111 = scalar_lea.vmem %s0, %s110
      %p112 = scmp.lt.s32.totalorder %s12, 1
      %s113 = scalar_select %p112, %s12, 1
      %s114 = smul.addr %s113, 2
      %s115 = smul.addr %s114, 4
      %s116 = scalar_lea.vmem %s1, %s115
      %v119 = vld [vmem:[%s111] sm:$0xff]
      %v120 = vld [vmem:[%s111 + $0x8] sm:$0xf]
      %v121 = vld [vmem:[%s111 + $0xc] sm:$0xff]
      %v122 = vld [vmem:[%s111 + $0x14] sm:$0xf]
      %v123 = vmul.bf16 %v119, 1043676725
      %v124 = vmul.bf16 %v121, 1043676725
      %v127 = vunpack.c.l.b16 %v123
      %v128 = vunpack.c.l.b16 %v124
      %v129 = vpack.c.b16 %v128, %v127
      %v132 = vunpack.c.h.b16 %v119
      %v133 = vunpack.c.h.b16 %v121
      %v134 = vpack.c.b16 %v133, %v132
      %vm135 = vcmask 261120
      %v137 = vsel %vm135, %v129, 0
      %v140 = vsel %vm135, %v134, 0
      %142 = vmatprep.subr.bf16.mxu0 0
      %143 = vmatpush1.bf16.xpose.msra.mxu0 %v140
      %144 = vmatprep.subr.bf16.mxu0 0
      %145 = vmatpush1.bf16.xpose.msra.mxu0 0
      %146 = vmatprep.subr.bf16.mxu0 0
      %147 = vmatpush1.bf16.xpose.msra.mxu0 0
      %148 = vmatprep.subr.bf16.mxu0 0
      %149 = vmatpush1.bf16.xpose.msra.mxu0 0
      %150 = vmatprep.subr.bf16.mxu0 0
      %151 = vmatpush1.bf16.xpose.msra.mxu0 0
      %152 = vmatprep.subr.bf16.mxu0 0
      %153 = vmatpush1.bf16.xpose.msra.mxu0 0
      %154 = vmatprep.subr.bf16.mxu0 0
      %155 = vmatpush1.bf16.xpose.msra.mxu0 0
      %156 = vmatprep.subr.bf16.mxu0 0
      %157 = vmatpush1.bf16.xpose.msra.mxu0 0
      %158 = vmatprep.subr.bf16.mxu0 0
      %159 = vmatpush1.bf16.xpose.msra.mxu0 0
      %160 = vmatprep.subr.bf16.mxu0 0
      %161 = vmatpush1.bf16.xpose.msra.mxu0 0
      %162 = vmatprep.subr.bf16.mxu0 0
      %163 = vmatpush1.bf16.xpose.msra.mxu0 0
      %164 = vmatprep.subr.bf16.mxu0 0
      %165 = vmatpush1.bf16.xpose.msra.mxu0 0
      %166 = vmatprep.subr.bf16.mxu0 0
      %167 = vmatpush1.bf16.xpose.msra.mxu0 0
      %168 = vmatprep.subr.bf16.mxu0 0
      %169 = vmatpush1.bf16.xpose.msra.mxu0 0
      %170 = vmatprep.subr.bf16.mxu0 0
      %171 = vmatpush1.bf16.xpose.msra.mxu0 0
      %172 = vmatprep.subr.bf16.mxu0 0
      %173 = vmatpush1.bf16.xpose.msra.mxu0 0
      %174 = vmatprep.mubr.bf16.mxu0 0
      %175 = vmatmul.mubr.bf16.gmra.mrb[0].mxu0 %v137
      %v176 = vpop.f32.mrb[0].mxu0
      %v177 = vadd.f32 0.0, %v176
      %v178 = vpop.f32.mrb[0].mxu0
      %v179 = vpop.f32.mrb[0].mxu0
      %v180 = vadd.f32 0.0, %v179
      %v181 = vpop.f32.mrb[0].mxu0
      %182 = vdwg.mxu0
      %vm183 = vcmask 130048
      %v184 = vsel %vm183, %v177, -inf
      %185 = vmax.xlane.f32.xlu0 %v184
      %v186 = vpop.xlane.xlu0 %185
      %v187 = vsel %vm183, %v180, -inf
      %188 = vmax.xlane.f32.xlu0 %v187
      %v189 = vpop.xlane.xlu0 %188
      %v190 = vsub.f32 %v177, %v186
      %v191 = vsub.f32 %v180, %v189
      %v192 = vmul.f32 %v190, 1.442695
      %v193 = vpow.pop %v192
      %v194 = vmul.f32 %v191, 1.442695
      %v195 = vpow.pop %v194
      %v196 = vsel %vm183, %v193, 0.0
      %197 = vadd.xlane.f32.xlu0 %v196
      %v198 = vpop.xlane.xlu0 %197
      %v199 = vsel %vm183, %v195, 0.0
      %200 = vadd.xlane.f32.xlu0 %v199
      %v201 = vpop.xlane.xlu0 %200
      %v202 = vpack.c.bf16 %v195, %v193
      %v205 = vunpack.c.l.b16 %v120
      %v206 = vunpack.c.l.b16 %v122
      %v207 = vpack.c.b16 %v206, %v205
      %v210 = vsel %vm183, %v202, 0
      %212 = vmatprep.subr.bf16.mxu0 0
      %213 = vmatpush1.bf16.msra.mxu0 %v207
      %214 = vmatprep.subr.bf16.mxu0 0
      %215 = vmatpush1.bf16.msra.mxu0 0
      %216 = vmatprep.subr.bf16.mxu0 0
      %217 = vmatpush1.bf16.msra.mxu0 0
      %218 = vmatprep.subr.bf16.mxu0 0
      %219 = vmatpush1.bf16.msra.mxu0 0
      %220 = vmatprep.subr.bf16.mxu0 0
      %221 = vmatpush1.bf16.msra.mxu0 0
      %222 = vmatprep.subr.bf16.mxu0 0
      %223 = vmatpush1.bf16.msra.mxu0 0
      %224 = vmatprep.subr.bf16.mxu0 0
      %225 = vmatpush1.bf16.msra.mxu0 0
      %226 = vmatprep.subr.bf16.mxu0 0
      %227 = vmatpush1.bf16.msra.mxu0 0
      %228 = vmatprep.subr.bf16.mxu0 0
      %229 = vmatpush1.bf16.msra.mxu0 0
      %230 = vmatprep.subr.bf16.mxu0 0
      %231 = vmatpush1.bf16.msra.mxu0 0
      %232 = vmatprep.subr.bf16.mxu0 0
      %233 = vmatpush1.bf16.msra.mxu0 0
      %234 = vmatprep.subr.bf16.mxu0 0
      %235 = vmatpush1.bf16.msra.mxu0 0
      %236 = vmatprep.subr.bf16.mxu0 0
      %237 = vmatpush1.bf16.msra.mxu0 0
      %238 = vmatprep.subr.bf16.mxu0 0
      %239 = vmatpush1.bf16.msra.mxu0 0
      %240 = vmatprep.subr.bf16.mxu0 0
      %241 = vmatpush1.bf16.msra.mxu0 0
      %242 = vmatprep.subr.bf16.mxu0 0
      %243 = vmatpush1.bf16.msra.mxu0 0
      %244 = vmatprep.mubr.bf16.mxu0 0
      %245 = vmatmul.mubr.bf16.gmra.mrb[0].mxu0 %v210
      %v246 = vpop.f32.mrb[0].mxu0
      %v247 = vadd.f32 0.0, %v246
      %v248 = vpop.f32.mrb[0].mxu0
      %v249 = vpop.f32.mrb[0].mxu0
      %v250 = vadd.f32 0.0, %v249
      %v251 = vpop.f32.mrb[0].mxu0
      %252 = vdwg.mxu0
      %v253 = vrcp.pop %v198
      %v254 = vrcp.pop %v201
      %v255 = vmul.f32 %v247, %v253
      %v256 = vmul.f32 %v250, %v254
      %257 = vrot.lane.b32.xlu0 %v129, 96
      %v258 = vpop.permute.xlu0 %257
      %259 = vrot.lane.b32.xlu0 %v134, 96
      %v260 = vpop.permute.xlu0 %259
      %v262 = vsel %vm135, %v258, 0
      %v265 = vsel %vm135, %v260, 0
      %267 = vmatprep.subr.bf16.mxu0 0
      %268 = vmatpush1.bf16.xpose.msra.mxu0 %v265
      %269 = vmatprep.subr.bf16.mxu0 0
      %270 = vmatpush1.bf16.xpose.msra.mxu0 0
      %271 = vmatprep.subr.bf16.mxu0 0
      %272 = vmatpush1.bf16.xpose.msra.mxu0 0
      %273 = vmatprep.subr.bf16.mxu0 0
      %274 = vmatpush1.bf16.xpose.msra.mxu0 0
      %275 = vmatprep.subr.bf16.mxu0 0
      %276 = vmatpush1.bf16.xpose.msra.mxu0 0
      %277 = vmatprep.subr.bf16.mxu0 0
      %278 = vmatpush1.bf16.xpose.msra.mxu0 0
      %279 = vmatprep.subr.bf16.mxu0 0
      %280 = vmatpush1.bf16.xpose.msra.mxu0 0
      %281 = vmatprep.subr.bf16.mxu0 0
      %282 = vmatpush1.bf16.xpose.msra.mxu0 0
      %283 = vmatprep.subr.bf16.mxu0 0
      %284 = vmatpush1.bf16.xpose.msra.mxu0 0
      %285 = vmatprep.subr.bf16.mxu0 0
      %286 = vmatpush1.bf16.xpose.msra.mxu0 0
      %287 = vmatprep.subr.bf16.mxu0 0
      %288 = vmatpush1.bf16.xpose.msra.mxu0 0
      %289 = vmatprep.subr.bf16.mxu0 0
      %290 = vmatpush1.bf16.xpose.msra.mxu0 0
      %291 = vmatprep.subr.bf16.mxu0 0
      %292 = vmatpush1.bf16.xpose.msra.mxu0 0
      %293 = vmatprep.subr.bf16.mxu0 0
      %294 = vmatpush1.bf16.xpose.msra.mxu0 0
      %295 = vmatprep.subr.bf16.mxu0 0
      %296 = vmatpush1.bf16.xpose.msra.mxu0 0
      %297 = vmatprep.subr.bf16.mxu0 0
      %298 = vmatpush1.bf16.xpose.msra.mxu0 0
      %299 = vmatprep.mubr.bf16.mxu0 0
      %300 = vmatmul.mubr.bf16.gmra.mrb[0].mxu0 %v262
      %v301 = vpop.f32.mrb[0].mxu0
      %v302 = vadd.f32 0.0, %v301
      %v303 = vpop.f32.mrb[0].mxu0
      %v304 = vpop.f32.mrb[0].mxu0
      %v305 = vadd.f32 0.0, %v304
      %v306 = vpop.f32.mrb[0].mxu0
      %307 = vdwg.mxu0
      %v308 = vsel %vm183, %v302, -inf
      %309 = vmax.xlane.f32.xlu0 %v308
      %v310 = vpop.xlane.xlu0 %309
      %v311 = vsel %vm183, %v305, -inf
      %312 = vmax.xlane.f32.xlu0 %v311
      %v313 = vpop.xlane.xlu0 %312
      %v314 = vsub.f32 %v302, %v310
      %v315 = vsub.f32 %v305, %v313
      %v316 = vmul.f32 %v314, 1.442695
      %v317 = vpow.pop %v316
      %v318 = vmul.f32 %v315, 1.442695
      %v319 = vpow.pop %v318
      %v320 = vsel %vm183, %v317, 0.0
      %321 = vadd.xlane.f32.xlu0 %v320
      %v322 = vpop.xlane.xlu0 %321
      %v323 = vsel %vm183, %v319, 0.0
      %324 = vadd.xlane.f32.xlu0 %v323
      %v325 = vpop.xlane.xlu0 %324
      %v326 = vpack.c.bf16 %v319, %v317
      %327 = vrot.lane.b32.xlu0 %v207, 96
      %v328 = vpop.permute.xlu0 %327
      %v331 = vsel %vm183, %v326, 0
      %333 = vmatprep.subr.bf16.mxu0 0
      %334 = vmatpush1.bf16.msra.mxu0 %v328
      %335 = vmatprep.subr.bf16.mxu0 0
      %336 = vmatpush1.bf16.msra.mxu0 0
      %337 = vmatprep.subr.bf16.mxu0 0
      %338 = vmatpush1.bf16.msra.mxu0 0
      %339 = vmatprep.subr.bf16.mxu0 0
      %340 = vmatpush1.bf16.msra.mxu0 0
      %341 = vmatprep.subr.bf16.mxu0 0
      %342 = vmatpush1.bf16.msra.mxu0 0
      %343 = vmatprep.subr.bf16.mxu0 0
      %344 = vmatpush1.bf16.msra.mxu0 0
      %345 = vmatprep.subr.bf16.mxu0 0
      %346 = vmatpush1.bf16.msra.mxu0 0
      %347 = vmatprep.subr.bf16.mxu0 0
      %348 = vmatpush1.bf16.msra.mxu0 0
      %349 = vmatprep.subr.bf16.mxu0 0
      %350 = vmatpush1.bf16.msra.mxu0 0
      %351 = vmatprep.subr.bf16.mxu0 0
      %352 = vmatpush1.bf16.msra.mxu0 0
      %353 = vmatprep.subr.bf16.mxu0 0
      %354 = vmatpush1.bf16.msra.mxu0 0
      %355 = vmatprep.subr.bf16.mxu0 0
      %356 = vmatpush1.bf16.msra.mxu0 0
      %357 = vmatprep.subr.bf16.mxu0 0
      %358 = vmatpush1.bf16.msra.mxu0 0
      %359 = vmatprep.subr.bf16.mxu0 0
      %360 = vmatpush1.bf16.msra.mxu0 0
      %361 = vmatprep.subr.bf16.mxu0 0
      %362 = vmatpush1.bf16.msra.mxu0 0
      %363 = vmatprep.subr.bf16.mxu0 0
      %364 = vmatpush1.bf16.msra.mxu0 0
      %365 = vmatprep.mubr.bf16.mxu0 0
      %366 = vmatmul.mubr.bf16.gmra.mrb[0].mxu0 %v331
      %v367 = vpop.f32.mrb[0].mxu0
      %v368 = vadd.f32 0.0, %v367
      %v369 = vpop.f32.mrb[0].mxu0
      %v370 = vpop.f32.mrb[0].mxu0
      %v371 = vadd.f32 0.0, %v370
      %v372 = vpop.f32.mrb[0].mxu0
      %373 = vdwg.mxu0
      %v374 = vrcp.pop %v322
      %v375 = vrcp.pop %v325
      %v376 = vmul.f32 %v368, %v374
      %v377 = vmul.f32 %v371, %v375
      %378 = vrot.lane.b32.xlu0 %v129, 64
      %v379 = vpop.permute.xlu0 %378
      %380 = vrot.lane.b32.xlu0 %v134, 64
      %v381 = vpop.permute.xlu0 %380
      %v383 = vsel %vm135, %v379, 0
      %v386 = vsel %vm135, %v381, 0
      %388 = vmatprep.subr.bf16.mxu0 0
      %389 = vmatpush1.bf16.xpose.msra.mxu0 %v386
      %390 = vmatprep.subr.bf16.mxu0 0
      %391 = vmatpush1.bf16.xpose.msra.mxu0 0
      %392 = vmatprep.subr.bf16.mxu0 0
      %393 = vmatpush1.bf16.xpose.msra.mxu0 0
      %394 = vmatprep.subr.bf16.mxu0 0
      %395 = vmatpush1.bf16.xpose.msra.mxu0 0
      %396 = vmatprep.subr.bf16.mxu0 0
      %397 = vmatpush1.bf16.xpose.msra.mxu0 0
      %398 = vmatprep.subr.bf16.mxu0 0
      %399 = vmatpush1.bf16.xpose.msra.mxu0 0
      %400 = vmatprep.subr.bf16.mxu0 0
      %401 = vmatpush1.bf16.xpose.msra.mxu0 0
      %402 = vmatprep.subr.bf16.mxu0 0
      %403 = vmatpush1.bf16.xpose.msra.mxu0 0
      %404 = vmatprep.subr.bf16.mxu0 0
      %405 = vmatpush1.bf16.xpose.msra.mxu0 0
      %406 = vmatprep.subr.bf16.mxu0 0
      %407 = vmatpush1.bf16.xpose.msra.mxu0 0
      %408 = vmatprep.subr.bf16.mxu0 0
      %409 = vmatpush1.bf16.xpose.msra.mxu0 0
      %410 = vmatprep.subr.bf16.mxu0 0
      %411 = vmatpush1.bf16.xpose.msra.mxu0 0
      %412 = vmatprep.subr.bf16.mxu0 0
      %413 = vmatpush1.bf16.xpose.msra.mxu0 0
      %414 = vmatprep.subr.bf16.mxu0 0
      %415 = vmatpush1.bf16.xpose.msra.mxu0 0
      %416 = vmatprep.subr.bf16.mxu0 0
      %417 = vmatpush1.bf16.xpose.msra.mxu0 0
      %418 = vmatprep.subr.bf16.mxu0 0
      %419 = vmatpush1.bf16.xpose.msra.mxu0 0
      %420 = vmatprep.mubr.bf16.mxu0 0
      %421 = vmatmul.mubr.bf16.gmra.mrb[0].mxu0 %v383
      %v422 = vpop.f32.mrb[0].mxu0
      %v423 = vadd.f32 0.0, %v422
      %v424 = vpop.f32.mrb[0].mxu0
      %v425 = vpop.f32.mrb[0].mxu0
      %v426 = vadd.f32 0.0, %v425
      %v427 = vpop.f32.mrb[0].mxu0
      %428 = vdwg.mxu0
      %v429 = vsel %vm183, %v423, -inf
      %430 = vmax.xlane.f32.xlu0 %v429
      %v431 = vpop.xlane.xlu0 %430
      %v432 = vsel %vm183, %v426, -inf
      %433 = vmax.xlane.f32.xlu0 %v432
      %v434 = vpop.xlane.xlu0 %433
      %v435 = vsub.f32 %v423, %v431
      %v436 = vsub.f32 %v426, %v434
      %v437 = vmul.f32 %v435, 1.442695
      %v438 = vpow.pop %v437
      %v439 = vmul.f32 %v436, 1.442695
      %v440 = vpow.pop %v439
      %v441 = vsel %vm183, %v438, 0.0
      %442 = vadd.xlane.f32.xlu0 %v441
      %v443 = vpop.xlane.xlu0 %442
      %v444 = vsel %vm183, %v440, 0.0
      %445 = vadd.xlane.f32.xlu0 %v444
      %v446 = vpop.xlane.xlu0 %445
      %v447 = vpack.c.bf16 %v440, %v438
      %448 = vrot.lane.b32.xlu0 %v207, 64
      %v449 = vpop.permute.xlu0 %448
      %v452 = vsel %vm183, %v447, 0
      %454 = vmatprep.subr.bf16.mxu0 0
      %455 = vmatpush1.bf16.msra.mxu0 %v449
      %456 = vmatprep.subr.bf16.mxu0 0
      %457 = vmatpush1.bf16.msra.mxu0 0
      %458 = vmatprep.subr.bf16.mxu0 0
      %459 = vmatpush1.bf16.msra.mxu0 0
      %460 = vmatprep.subr.bf16.mxu0 0
      %461 = vmatpush1.bf16.msra.mxu0 0
      %462 = vmatprep.subr.bf16.mxu0 0
      %463 = vmatpush1.bf16.msra.mxu0 0
      %464 = vmatprep.subr.bf16.mxu0 0
      %465 = vmatpush1.bf16.msra.mxu0 0
      %466 = vmatprep.subr.bf16.mxu0 0
      %467 = vmatpush1.bf16.msra.mxu0 0
      %468 = vmatprep.subr.bf16.mxu0 0
      %469 = vmatpush1.bf16.msra.mxu0 0
      %470 = vmatprep.subr.bf16.mxu0 0
      %471 = vmatpush1.bf16.msra.mxu0 0
      %472 = vmatprep.subr.bf16.mxu0 0
      %473 = vmatpush1.bf16.msra.mxu0 0
      %474 = vmatprep.subr.bf16.mxu0 0
      %475 = vmatpush1.bf16.msra.mxu0 0
      %476 = vmatprep.subr.bf16.mxu0 0
      %477 = vmatpush1.bf16.msra.mxu0 0
      %478 = vmatprep.subr.bf16.mxu0 0
      %479 = vmatpush1.bf16.msra.mxu0 0
      %480 = vmatprep.subr.bf16.mxu0 0
      %481 = vmatpush1.bf16.msra.mxu0 0
      %482 = vmatprep.subr.bf16.mxu0 0
      %483 = vmatpush1.bf16.msra.mxu0 0
      %484 = vmatprep.subr.bf16.mxu0 0
      %485 = vmatpush1.bf16.msra.mxu0 0
      %486 = vmatprep.mubr.bf16.mxu0 0
      %487 = vmatmul.mubr.bf16.gmra.mrb[0].mxu0 %v452
      %v488 = vpop.f32.mrb[0].mxu0
      %v489 = vadd.f32 0.0, %v488
      %v490 = vpop.f32.mrb[0].mxu0
      %v491 = vpop.f32.mrb[0].mxu0
      %v492 = vadd.f32 0.0, %v491
      %v493 = vpop.f32.mrb[0].mxu0
      %494 = vdwg.mxu0
      %v495 = vrcp.pop %v443
      %v496 = vrcp.pop %v446
      %v497 = vmul.f32 %v489, %v495
      %v498 = vmul.f32 %v492, %v496
      %499 = vrot.lane.b32.xlu0 %v129, 32
      %v500 = vpop.permute.xlu0 %499
      %501 = vrot.lane.b32.xlu0 %v134, 32
      %v502 = vpop.permute.xlu0 %501
      %v504 = vsel %vm135, %v500, 0
      %v507 = vsel %vm135, %v502, 0
      %509 = vmatprep.subr.bf16.mxu0 0
      %510 = vmatpush1.bf16.xpose.msra.mxu0 %v507
      %511 = vmatprep.subr.bf16.mxu0 0
      %512 = vmatpush1.bf16.xpose.msra.mxu0 0
      %513 = vmatprep.subr.bf16.mxu0 0
      %514 = vmatpush1.bf16.xpose.msra.mxu0 0
      %515 = vmatprep.subr.bf16.mxu0 0
      %516 = vmatpush1.bf16.xpose.msra.mxu0 0
      %517 = vmatprep.subr.bf16.mxu0 0
      %518 = vmatpush1.bf16.xpose.msra.mxu0 0
      %519 = vmatprep.subr.bf16.mxu0 0
      %520 = vmatpush1.bf16.xpose.msra.mxu0 0
      %521 = vmatprep.subr.bf16.mxu0 0
      %522 = vmatpush1.bf16.xpose.msra.mxu0 0
      %523 = vmatprep.subr.bf16.mxu0 0
      %524 = vmatpush1.bf16.xpose.msra.mxu0 0
      %525 = vmatprep.subr.bf16.mxu0 0
      %526 = vmatpush1.bf16.xpose.msra.mxu0 0
      %527 = vmatprep.subr.bf16.mxu0 0
      %528 = vmatpush1.bf16.xpose.msra.mxu0 0
      %529 = vmatprep.subr.bf16.mxu0 0
      %530 = vmatpush1.bf16.xpose.msra.mxu0 0
      %531 = vmatprep.subr.bf16.mxu0 0
      %532 = vmatpush1.bf16.xpose.msra.mxu0 0
      %533 = vmatprep.subr.bf16.mxu0 0
      %534 = vmatpush1.bf16.xpose.msra.mxu0 0
      %535 = vmatprep.subr.bf16.mxu0 0
      %536 = vmatpush1.bf16.xpose.msra.mxu0 0
      %537 = vmatprep.subr.bf16.mxu0 0
      %538 = vmatpush1.bf16.xpose.msra.mxu0 0
      %539 = vmatprep.subr.bf16.mxu0 0
      %540 = vmatpush1.bf16.xpose.msra.mxu0 0
      %541 = vmatprep.mubr.bf16.mxu0 0
      %542 = vmatmul.mubr.bf16.gmra.mrb[0].mxu0 %v504
      %v543 = vpop.f32.mrb[0].mxu0
      %v544 = vadd.f32 0.0, %v543
      %v545 = vpop.f32.mrb[0].mxu0
      %v546 = vpop.f32.mrb[0].mxu0
      %v547 = vadd.f32 0.0, %v546
      %v548 = vpop.f32.mrb[0].mxu0
      %549 = vdwg.mxu0
      %v550 = vsel %vm183, %v544, -inf
      %551 = vmax.xlane.f32.xlu0 %v550
      %v552 = vpop.xlane.xlu0 %551
      %v553 = vsel %vm183, %v547, -inf
      %554 = vmax.xlane.f32.xlu0 %v553
      %v555 = vpop.xlane.xlu0 %554
      %v556 = vsub.f32 %v544, %v552
      %v557 = vsub.f32 %v547, %v555
      %v558 = vmul.f32 %v556, 1.442695
      %v559 = vpow.pop %v558
      %v560 = vmul.f32 %v557, 1.442695
      %v561 = vpow.pop %v560
      %v562 = vsel %vm183, %v559, 0.0
      %563 = vadd.xlane.f32.xlu0 %v562
      %v564 = vpop.xlane.xlu0 %563
      %v565 = vsel %vm183, %v561, 0.0
      %566 = vadd.xlane.f32.xlu0 %v565
      %v567 = vpop.xlane.xlu0 %566
      %v568 = vpack.c.bf16 %v561, %v559
      %569 = vrot.lane.b32.xlu0 %v207, 32
      %v570 = vpop.permute.xlu0 %569
      %v573 = vsel %vm183, %v568, 0
      %575 = vmatprep.subr.bf16.mxu0 0
      %576 = vmatpush1.bf16.msra.mxu0 %v570
      %577 = vmatprep.subr.bf16.mxu0 0
      %578 = vmatpush1.bf16.msra.mxu0 0
      %579 = vmatprep.subr.bf16.mxu0 0
      %580 = vmatpush1.bf16.msra.mxu0 0
      %581 = vmatprep.subr.bf16.mxu0 0
      %582 = vmatpush1.bf16.msra.mxu0 0
      %583 = vmatprep.subr.bf16.mxu0 0
      %584 = vmatpush1.bf16.msra.mxu0 0
      %585 = vmatprep.subr.bf16.mxu0 0
      %586 = vmatpush1.bf16.msra.mxu0 0
      %587 = vmatprep.subr.bf16.mxu0 0
      %588 = vmatpush1.bf16.msra.mxu0 0
      %589 = vmatprep.subr.bf16.mxu0 0
      %590 = vmatpush1.bf16.msra.mxu0 0
      %591 = vmatprep.subr.bf16.mxu0 0
      %592 = vmatpush1.bf16.msra.mxu0 0
      %593 = vmatprep.subr.bf16.mxu0 0
      %594 = vmatpush1.bf16.msra.mxu0 0
      %595 = vmatprep.subr.bf16.mxu0 0
      %596 = vmatpush1.bf16.msra.mxu0 0
      %597 = vmatprep.subr.bf16.mxu0 0
      %598 = vmatpush1.bf16.msra.mxu0 0
      %599 = vmatprep.subr.bf16.mxu0 0
      %600 = vmatpush1.bf16.msra.mxu0 0
      %601 = vmatprep.subr.bf16.mxu0 0
      %602 = vmatpush1.bf16.msra.mxu0 0
      %603 = vmatprep.subr.bf16.mxu0 0
      %604 = vmatpush1.bf16.msra.mxu0 0
      %605 = vmatprep.subr.bf16.mxu0 0
      %606 = vmatpush1.bf16.msra.mxu0 0
      %607 = vmatprep.mubr.bf16.mxu0 0
      %608 = vmatmul.mubr.bf16.gmra.mrb[0].mxu0 %v573
      %v609 = vpop.f32.mrb[0].mxu0
      %v610 = vadd.f32 0.0, %v609
      %v611 = vpop.f32.mrb[0].mxu0
      %v612 = vpop.f32.mrb[0].mxu0
      %v613 = vadd.f32 0.0, %v612
      %v614 = vpop.f32.mrb[0].mxu0
      %615 = vdwg.mxu0
      %v616 = vrcp.pop %v564
      %v617 = vrcp.pop %v567
      %v618 = vmul.f32 %v610, %v616
      %v619 = vmul.f32 %v613, %v617
      %622 = vrot.lane.b32.xlu0 %v376, 32
      %v623 = vpop.permute.xlu0 %622
      %624 = vrot.lane.b32.xlu0 %v377, 32
      %v625 = vpop.permute.xlu0 %624
      %630 = vrot.lane.b32.xlu0 %v497, 64
      %v631 = vpop.permute.xlu0 %630
      %632 = vrot.lane.b32.xlu0 %v498, 64
      %v633 = vpop.permute.xlu0 %632
      %638 = vrot.lane.b32.xlu0 %v618, 96
      %v639 = vpop.permute.xlu0 %638
      %640 = vrot.lane.b32.xlu0 %v619, 96
      %v641 = vpop.permute.xlu0 %640
      %v644 = vsel %vm135, %v255, %v623
      %v645 = vsel %vm135, %v256, %v625
      %vm646 = vcmask 523264
      %v647 = vsel %vm646, %v644, %v631
      %v648 = vsel %vm646, %v645, %v633
      %vm649 = vcmask 785408
      %v650 = vsel %vm649, %v647, %v639
      %v651 = vsel %vm649, %v648, %v641
      %v652 = vpack.c.bf16 %v651, %v650
      %v654 = vunpack.c.l.b16 %v652
      %v655 = vunpack.c.h.b16 %v652
      %v656 = vpack.c.b16 %v654, %v654
      %v657 = vpack.c.b16 %v655, %v655
      %660 = vst [vmem:[%s116] sm:$0xf] %v656
      %661 = vst [vmem:[%s116 + $0x4] sm:$0xf] %v657
      %p662 = scmp.lt.s32.totalorder %s12, 1
      %s663 = scalar_select %p662, %s12, 1
      %s664 = smul.addr %s663, 2
      %s665 = smul.addr %s664, 4
      %s666 = scalar_lea.vmem %s1, %s665
      // Predicated region
      $region25: #{transformer_encoder.9} parent=23 // pred_check
        %p667 = pneg %p56
      $region26: #{transformer_encoder.9} parent=23 // pred_check_branch
        %669 = sbr.rel (%p667) target = $region28
      $region27: #{transformer_encoder.9} parent=23 // pred_region
        _
      $region28: #{transformer_encoder.9} parent=23 // pred_fallthru
        _
    $region24: #{transformer_encoder.9} parent=5 // pred_fallthru
      _
    %p670 = scmp.le.s32.totalorder 2, %s7
    // Predicated region
    $region29: #{transformer_encoder.9} parent=5 // pred_check
      %p671 = pneg %p670
    $region30: #{transformer_encoder.9} parent=5 // pred_check_branch
      %673 = sbr.rel (%p671) target = $region32
    $region31: #{transformer_encoder.9} parent=5 // pred_region
      %s674 = ssub.s32 %s7, 2
      // Predicated region
      $region33: #{transformer_encoder.9} parent=31 // pred_check
        %p675 = pneg %p62
      $region34: #{transformer_encoder.9} parent=31 // pred_check_branch
        %677 = sbr.rel (%p675) target = $region36
      $region35: #{transformer_encoder.9} parent=31 // pred_region
        %p678 = scmp.lt.s32.totalorder %s13, 1
        %s679 = scalar_select %p678, %s13, 1
        %s680 = smul.addr %s679, 2
        %s681 = smul.addr %s680, 4
        %s682 = scalar_lea.vmem %s1, %s681
      $region36: #{transformer_encoder.9} parent=31 // pred_fallthru
        _
    $region32: #{transformer_encoder.9} parent=5 // pred_fallthru
      _
  $region6: #{transformer_encoder.9} parent=0 // loop_footer
    %s11 = sadd.s32 1, %s7
  $region7: #{transformer_encoder.9} parent=0 // loop_footer_branch
    %6 = sbr.rel target = $region3
  $region8: #{transformer_encoder.9} parent=0 // loop_exit
    _

// kernel: transformer_encoder.11
$region0: #{transformer_encoder.11}
  #allocation0 [shape = 'u32[]', space=smem, size = 0x4, offset = 0x4, fixed_abs, tag = 'smem constant byte address 0x4 - core index']
  #allocation1 [shape = 'u32[144,128]{1,0:T(1,128)}', space=vmem, size = 0x12000, scoped, tag = 'internal scratch']
  #allocation2 [shape = 'f32[32,128]{1,0:T(8,128)}', space=vmem, size = 0x4000, scoped, tag = 'scratch operand']
  %s0 = inlined_call_operand.vmem [shape: bf16[32,128], index: 0, kind: input, shape index: {}]
  %s1 = inlined_call_operand.vmem [shape: bf16[128,256], index: 1, kind: input, shape index: {}]
  %s2 = inlined_call_operand.vmem [shape: f32[1,256], index: 2, kind: input, shape index: {}]
  %s3 = inlined_call_operand.vmem [shape: bf16[256,128], index: 3, kind: input, shape index: {}]
  %s4 = inlined_call_operand.vmem [shape: f32[1,128], index: 4, kind: input, shape index: {}]
  %s5 = inlined_call_operand.vmem [shape: f32[1,128], index: 5, kind: input, shape index: {}]
  %s6 = inlined_call_operand.vmem [shape: f32[1,128], index: 6, kind: input, shape index: {}]
  %s7 = inlined_call_operand.vmem [shape: bf16[32,128], index: 7, kind: output, shape index: {}]
  %s8 = sld [smem:[#allocation0]]
  $region46: #{transformer_encoder.11} parent=0
    _
  %s10 = ssub.s32 1, %s8
  %s11 = scalar_select 0, %s10, %s8
  // Predicated region
  $region2: #{transformer_encoder.11} parent=0 // pred_check
    _
  $region3: #{transformer_encoder.11} parent=0 // pred_check_branch
    %13 = sbr.rel (0) target = $region5
  $region4: #{transformer_encoder.11} parent=0 // pred_region
    _
  $region5: #{transformer_encoder.11} parent=0 // pred_fallthru
    _
  // Predicated region
  $region6: #{transformer_encoder.11} parent=0 // pred_check
    _
  $region7: #{transformer_encoder.11} parent=0 // pred_check_branch
    %15 = sbr.rel (0) target = $region9
  $region8: #{transformer_encoder.11} parent=0 // pred_region
    _
  $region9: #{transformer_encoder.11} parent=0 // pred_fallthru
    _
  // Predicated region
  $region10: #{transformer_encoder.11} parent=0 // pred_check
    _
  $region11: #{transformer_encoder.11} parent=0 // pred_check_branch
    %17 = sbr.rel (0) target = $region13
  $region12: #{transformer_encoder.11} parent=0 // pred_region
    _
  $region13: #{transformer_encoder.11} parent=0 // pred_fallthru
    _
  // Predicated region
  $region14: #{transformer_encoder.11} parent=0 // pred_check
    _
  $region15: #{transformer_encoder.11} parent=0 // pred_check_branch
    %19 = sbr.rel (0) target = $region17
  $region16: #{transformer_encoder.11} parent=0 // pred_region
    _
  $region17: #{transformer_encoder.11} parent=0 // pred_fallthru
    _
  // Predicated region
  $region18: #{transformer_encoder.11} parent=0 // pred_check
    _
  $region19: #{transformer_encoder.11} parent=0 // pred_check_branch
    %21 = sbr.rel (0) target = $region21
  $region20: #{transformer_encoder.11} parent=0 // pred_region
    _
  $region21: #{transformer_encoder.11} parent=0 // pred_fallthru
    _
  // Predicated region
  $region22: #{transformer_encoder.11} parent=0 // pred_check
    _
  $region23: #{transformer_encoder.11} parent=0 // pred_check_branch
    %23 = sbr.rel (0) target = $region25
  $region24: #{transformer_encoder.11} parent=0 // pred_region
    _
  $region25: #{transformer_encoder.11} parent=0 // pred_fallthru
    _
  // Predicated region
  $region26: #{transformer_encoder.11} parent=0 // pred_check
    _
  $region27: #{transformer_encoder.11} parent=0 // pred_check_branch
    %25 = sbr.rel (0) target = $region29
  $region28: #{transformer_encoder.11} parent=0 // pred_region
    _
  $region29: #{transformer_encoder.11} parent=0 // pred_fallthru
    _
  %p27 = scmp.eq.s32.totalorder 0, 0
  // Predicated region
  $region30: #{transformer_encoder.11} parent=0 // pred_check
    %p28 = pneg %p27
  $region31: #{transformer_encoder.11} parent=0 // pred_check_branch
    %30 = sbr.rel (%p28) target = $region33
  $region32: #{transformer_encoder.11} parent=0 // pred_region
    %31 = vst [vmem:[#allocation2] sm:$0xff] 0.0
    %32 = vst [vmem:[#allocation2 + $0x8] sm:$0xff] 0.0
    %33 = vst [vmem:[#allocation2 + $0x10] sm:$0xff] 0.0
    %34 = vst [vmem:[#allocation2 + $0x18] sm:$0xff] 0.0
  $region33: #{transformer_encoder.11} parent=0 // pred_fallthru
    _
  %v35 = vld [vmem:[%s0] sm:$0xf]
  %v36 = vld [vmem:[%s0 + $0x4] sm:$0xf]
  %v37 = vld [vmem:[%s0 + $0x8] sm:$0xf]
  %v38 = vld [vmem:[%s0 + $0xc] sm:$0xf]
  %v39 = vld [vmem:[%s1] sm:$0xff]
  %v40 = vld [vmem:[%s1 + $0x8] sm:$0xff]
  %v41 = vld [vmem:[%s1 + $0x10] sm:$0xff]
  %v42 = vld [vmem:[%s1 + $0x18] sm:$0xff]
  %v43 = vld [vmem:[%s1 + $0x20] sm:$0xff]
  %v44 = vld [vmem:[%s1 + $0x28] sm:$0xff]
  %v45 = vld [vmem:[%s1 + $0x30] sm:$0xff]
  %v46 = vld [vmem:[%s1 + $0x38] sm:$0xff]
  %v47 = vld [vmem:[%s1 + $0x40] sm:$0xff]
  %v48 = vld [vmem:[%s1 + $0x48] sm:$0xff]
  %v49 = vld [vmem:[%s1 + $0x50] sm:$0xff]
  %v50 = vld [vmem:[%s1 + $0x58] sm:$0xff]
  %v51 = vld [vmem:[%s1 + $0x60] sm:$0xff]
  %v52 = vld [vmem:[%s1 + $0x68] sm:$0xff]
  %v53 = vld [vmem:[%s1 + $0x70] sm:$0xff]
  %v54 = vld [vmem:[%s1 + $0x78] sm:$0xff]
  %v55 = vld [vmem:[%s2] sm:$0x3]
  %v57 = vlaneseq
  %v58 = vshrl.u32 %v57, 7
  %v59 = vsub.s32 0, %v58
  %v60 = vrot.slane %v55, %v59
  %v61 = vlaneseq
  %v62 = vshrl.u32 %v61, 7
  %v63 = vsub.s32 1, %v62
  %v64 = vrot.slane %v55, %v63
  %v71 = vunpack.c.l.b16 %v35
  %v72 = vunpack.c.l.b16 %v36
  %v73 = vunpack.c.l.b16 %v37
  %v74 = vunpack.c.l.b16 %v38
  %v75 = vpack.c.b16 %v72, %v71
  %v76 = vpack.c.b16 %v74, %v73
  %v95 = vunpack.c.l.b16 %v39
  %v96 = vunpack.c.h.b16 %v39
  %v97 = vunpack.c.l.b16 %v40
  %v98 = vunpack.c.h.b16 %v40
  %v99 = vunpack.c.l.b16 %v41
  %v100 = vunpack.c.h.b16 %v41
  %v101 = vunpack.c.l.b16 %v42
  %v102 = vunpack.c.h.b16 %v42
  %v103 = vunpack.c.l.b16 %v43
  %v104 = vunpack.c.h.b16 %v43
  %v105 = vunpack.c.l.b16 %v44
  %v106 = vunpack.c.h.b16 %v44
  %v107 = vunpack.c.l.b16 %v45
  %v108 = vunpack.c.h.b16 %v45
  %v109 = vunpack.c.l.b16 %v46
  %v110 = vunpack.c.h.b16 %v46
  %v111 = vunpack.c.l.b16 %v47
  %v112 = vunpack.c.h.b16 %v47
  %v113 = vunpack.c.l.b16 %v48
  %v114 = vunpack.c.h.b16 %v48
  %v115 = vunpack.c.l.b16 %v49
  %v116 = vunpack.c.h.b16 %v49
  %v117 = vunpack.c.l.b16 %v50
  %v118 = vunpack.c.h.b16 %v50
  %v119 = vunpack.c.l.b16 %v51
  %v120 = vunpack.c.h.b16 %v51
  %v121 = vunpack.c.l.b16 %v52
  %v122 = vunpack.c.h.b16 %v52
  %v123 = vunpack.c.l.b16 %v53
  %v124 = vunpack.c.h.b16 %v53
  %v125 = vunpack.c.l.b16 %v54
  %v126 = vunpack.c.h.b16 %v54
  %v127 = vpack.c.b16 %v97, %v95
  %v128 = vpack.c.b16 %v98, %v96
  %v129 = vpack.c.b16 %v101, %v99
  %v130 = vpack.c.b16 %v102, %v100
  %v131 = vpack.c.b16 %v105, %v103
  %v132 = vpack.c.b16 %v106, %v104
  %v133 = vpack.c.b16 %v109, %v107
  %v134 = vpack.c.b16 %v110, %v108
  %v135 = vpack.c.b16 %v113, %v111
  %v136 = vpack.c.b16 %v114, %v112
  %v137 = vpack.c.b16 %v117, %v115
  %v138 = vpack.c.b16 %v118, %v116
  %v139 = vpack.c.b16 %v121, %v119
  %v140 = vpack.c.b16 %v122, %v120
  %v141 = vpack.c.b16 %v125, %v123
  %v142 = vpack.c.b16 %v126, %v124
  %159 = vmatprep.subr.bf16.mxu0 %v128
  %160 = vmatpush1.bf16.msra.mxu0 %v127
  %161 = vmatprep.subr.bf16.mxu0 %v130
  %162 = vmatpush1.bf16.msra.mxu0 %v129
  %163 = vmatprep.subr.bf16.mxu0 %v132
  %164 = vmatpush1.bf16.msra.mxu0 %v131
  %165 = vmatprep.subr.bf16.mxu0 %v134
  %166 = vmatpush1.bf16.msra.mxu0 %v133
  %167 = vmatprep.subr.bf16.mxu0 %v136
  %168 = vmatpush1.bf16.msra.mxu0 %v135
  %169 = vmatprep.subr.bf16.mxu0 %v138
  %170 = vmatpush1.bf16.msra.mxu0 %v137
  %171 = vmatprep.subr.bf16.mxu0 %v140
  %172 = vmatpush1.bf16.msra.mxu0 %v139
  %173 = vmatprep.subr.bf16.mxu0 %v142
  %174 = vmatpush1.bf16.msra.mxu0 %v141
  %175 = vmatprep.subr.bf16.mxu0 0
  %176 = vmatpush1.bf16.msra.mxu0 0
  %177 = vmatprep.subr.bf16.mxu0 0
  %178 = vmatpush1.bf16.msra.mxu0 0
  %179 = vmatprep.subr.bf16.mxu0 0
  %180 = vmatpush1.bf16.msra.mxu0 0
  %181 = vmatprep.subr.bf16.mxu0 0
  %182 = vmatpush1.bf16.msra.mxu0 0
  %183 = vmatprep.subr.bf16.mxu0 0
  %184 = vmatpush1.bf16.msra.mxu0 0
  %185 = vmatprep.subr.bf16.mxu0 0
  %186 = vmatpush1.bf16.msra.mxu0 0
  %187 = vmatprep.subr.bf16.mxu0 0
  %188 = vmatpush1.bf16.msra.mxu0 0
  %189 = vmatprep.subr.bf16.mxu0 0
  %190 = vmatpush1.bf16.msra.mxu0 0
  %191 = vmatprep.mubr.bf16.mxu0 0
  %192 = vmatmul.mubr.bf16.gmra.mrb[0].mxu0 %v75
  %v193 = vpop.f32.mrb[0].mxu0
  %v194 = vadd.f32 %v60, %v193
  %v195 = vpop.f32.mrb[0].mxu0
  %v196 = vadd.f32 %v64, %v195
  %v197 = vpop.f32.mrb[0].mxu0
  %v198 = vadd.f32 %v60, %v197
  %v199 = vpop.f32.mrb[0].mxu0
  %v200 = vadd.f32 %v64, %v199
  %201 = vmatprep.mubr.bf16.mxu0 0
  %202 = vmatmul.mubr.bf16.gmra.mrb[0].mxu0 %v76
  %v203 = vpop.f32.mrb[0].mxu0
  %v204 = vadd.f32 %v60, %v203
  %v205 = vpop.f32.mrb[0].mxu0
  %v206 = vadd.f32 %v64, %v205
  %v207 = vpop.f32.mrb[0].mxu0
  %v208 = vadd.f32 %v60, %v207
  %v209 = vpop.f32.mrb[0].mxu0
  %v210 = vadd.f32 %v64, %v209
  %211 = vdwg.mxu0
  %v212 = vmax.f32 %v194, 0.0
  %v213 = vmax.f32 %v196, 0.0
  %v214 = vmax.f32 %v198, 0.0
  %v215 = vmax.f32 %v200, 0.0
  %v216 = vmax.f32 %v204, 0.0
  %v217 = vmax.f32 %v206, 0.0
  %v218 = vmax.f32 %v208, 0.0
  %v219 = vmax.f32 %v210, 0.0
  %v220 = vld [vmem:[#allocation2] sm:$0xff]
  %v221 = vld [vmem:[#allocation2 + $0x8] sm:$0xff]
  %v222 = vld [vmem:[#allocation2 + $0x10] sm:$0xff]
  %v223 = vld [vmem:[#allocation2 + $0x18] sm:$0xff]
  %v224 = vpack.c.bf16 %v214, %v212
  %v225 = vpack.c.bf16 %v215, %v213
  %v226 = vpack.c.bf16 %v218, %v216
  %v227 = vpack.c.bf16 %v219, %v217
  %v228 = vld [vmem:[%s3] sm:$0xf]
  %v229 = vld [vmem:[%s3 + $0x4] sm:$0xf]
  %v230 = vld [vmem:[%s3 + $0x8] sm:$0xf]
  %v231 = vld [vmem:[%s3 + $0xc] sm:$0xf]
  %v232 = vld [vmem:[%s3 + $0x10] sm:$0xf]
  %v233 = vld [vmem:[%s3 + $0x14] sm:$0xf]
  %v234 = vld [vmem:[%s3 + $0x18] sm:$0xf]
  %v235 = vld [vmem:[%s3 + $0x1c] sm:$0xf]
  %v236 = vld [vmem:[%s3 + $0x20] sm:$0xf]
  %v237 = vld [vmem:[%s3 + $0x24] sm:$0xf]
  %v238 = vld [vmem:[%s3 + $0x28] sm:$0xf]
  %v239 = vld [vmem:[%s3 + $0x2c] sm:$0xf]
  %v240 = vld [vmem:[%s3 + $0x30] sm:$0xf]
  %v241 = vld [vmem:[%s3 + $0x34] sm:$0xf]
  %v242 = vld [vmem:[%s3 + $0x38] sm:$0xf]
  %v243 = vld [vmem:[%s3 + $0x3c] sm:$0xf]
  %v244 = vld [vmem:[%s3 + $0x40] sm:$0xf]
  %v245 = vld [vmem:[%s3 + $0x44] sm:$0xf]
  %v246 = vld [vmem:[%s3 + $0x48] sm:$0xf]
  %v247 = vld [vmem:[%s3 + $0x4c] sm:$0xf]
  %v248 = vld [vmem:[%s3 + $0x50] sm:$0xf]
  %v249 = vld [vmem:[%s3 + $0x54] sm:$0xf]
  %v250 = vld [vmem:[%s3 + $0x58] sm:$0xf]
  %v251 = vld [vmem:[%s3 + $0x5c] sm:$0xf]
  %v252 = vld [vmem:[%s3 + $0x60] sm:$0xf]
  %v253 = vld [vmem:[%s3 + $0x64] sm:$0xf]
  %v254 = vld [vmem:[%s3 + $0x68] sm:$0xf]
  %v255 = vld [vmem:[%s3 + $0x6c] sm:$0xf]
  %v256 = vld [vmem:[%s3 + $0x70] sm:$0xf]
  %v257 = vld [vmem:[%s3 + $0x74] sm:$0xf]
  %v258 = vld [vmem:[%s3 + $0x78] sm:$0xf]
  %v259 = vld [vmem:[%s3 + $0x7c] sm:$0xf]
  %v292 = vunpack.c.l.b16 %v228
  %v293 = vunpack.c.l.b16 %v229
  %v294 = vunpack.c.l.b16 %v230
  %v295 = vunpack.c.l.b16 %v231
  %v296 = vunpack.c.l.b16 %v232
  %v297 = vunpack.c.l.b16 %v233
  %v298 = vunpack.c.l.b16 %v234
  %v299 = vunpack.c.l.b16 %v235
  %v300 = vunpack.c.l.b16 %v236
  %v301 = vunpack.c.l.b16 %v237
  %v302 = vunpack.c.l.b16 %v238
  %v303 = vunpack.c.l.b16 %v239
  %v304 = vunpack.c.l.b16 %v240
  %v305 = vunpack.c.l.b16 %v241
  %v306 = vunpack.c.l.b16 %v242
  %v307 = vunpack.c.l.b16 %v243
  %v308 = vunpack.c.l.b16 %v244
  %v309 = vunpack.c.l.b16 %v245
  %v310 = vunpack.c.l.b16 %v246
  %v311 = vunpack.c.l.b16 %v247
  %v312 = vunpack.c.l.b16 %v248
  %v313 = vunpack.c.l.b16 %v249
  %v314 = vunpack.c.l.b16 %v250
  %v315 = vunpack.c.l.b16 %v251
  %v316 = vunpack.c.l.b16 %v252
  %v317 = vunpack.c.l.b16 %v253
  %v318 = vunpack.c.l.b16 %v254
  %v319 = vunpack.c.l.b16 %v255
  %v320 = vunpack.c.l.b16 %v256
  %v321 = vunpack.c.l.b16 %v257
  %v322 = vunpack.c.l.b16 %v258
  %v323 = vunpack.c.l.b16 %v259
  %v324 = vpack.c.b16 %v293, %v292
  %v325 = vpack.c.b16 %v295, %v294
  %v326 = vpack.c.b16 %v297, %v296
  %v327 = vpack.c.b16 %v299, %v298
  %v328 = vpack.c.b16 %v301, %v300
  %v329 = vpack.c.b16 %v303, %v302
  %v330 = vpack.c.b16 %v305, %v304
  %v331 = vpack.c.b16 %v307, %v306
  %v332 = vpack.c.b16 %v309, %v308
  %v333 = vpack.c.b16 %v311, %v310
  %v334 = vpack.c.b16 %v313, %v312
  %v335 = vpack.c.b16 %v315, %v314
  %v336 = vpack.c.b16 %v317, %v316
  %v337 = vpack.c.b16 %v319, %v318
  %v338 = vpack.c.b16 %v321, %v320
  %v339 = vpack.c.b16 %v323, %v322
  %356 = vmatprep.subr.bf16.mxu0 0
  %357 = vmatpush1.bf16.msra.mxu0 %v324
  %358 = vmatprep.subr.bf16.mxu0 0
  %359 = vmatpush1.bf16.msra.mxu0 %v325
  %360 = vmatprep.subr.bf16.mxu0 0
  %361 = vmatpush1.bf16.msra.mxu0 %v326
  %362 = vmatprep.subr.bf16.mxu0 0
  %363 = vmatpush1.bf16.msra.mxu0 %v327
  %364 = vmatprep.subr.bf16.mxu0 0
  %365 = vmatpush1.bf16.msra.mxu0 %v328
  %366 = vmatprep.subr.bf16.mxu0 0
  %367 = vmatpush1.bf16.msra.mxu0 %v329
  %368 = vmatprep.subr.bf16.mxu0 0
  %369 = vmatpush1.bf16.msra.mxu0 %v330
  %370 = vmatprep.subr.bf16.mxu0 0
  %371 = vmatpush1.bf16.msra.mxu0 %v331
  %372 = vmatprep.subr.bf16.mxu0 0
  %373 = vmatpush1.bf16.msra.mxu0 %v332
  %374 = vmatprep.subr.bf16.mxu0 0
  %375 = vmatpush1.bf16.msra.mxu0 %v333
  %376 = vmatprep.subr.bf16.mxu0 0
  %377 = vmatpush1.bf16.msra.mxu0 %v334
  %378 = vmatprep.subr.bf16.mxu0 0
  %379 = vmatpush1.bf16.msra.mxu0 %v335
  %380 = vmatprep.subr.bf16.mxu0 0
  %381 = vmatpush1.bf16.msra.mxu0 %v336
  %382 = vmatprep.subr.bf16.mxu0 0
  %383 = vmatpush1.bf16.msra.mxu0 %v337
  %384 = vmatprep.subr.bf16.mxu0 0
  %385 = vmatpush1.bf16.msra.mxu0 %v338
  %386 = vmatprep.subr.bf16.mxu0 0
  %387 = vmatpush1.bf16.msra.mxu0 %v339
  %388 = vmatprep.mubr.bf16.mxu0 %v225
  %389 = vmatmul.mubr.bf16.gmra.mrb[0].mxu0 %v224
  %v390 = vpop.f32.mrb[0].mxu0
  %v391 = vadd.f32 0.0, %v390
  %v392 = vpop.f32.mrb[0].mxu0
  %v393 = vpop.f32.mrb[0].mxu0
  %v394 = vadd.f32 0.0, %v393
  %v395 = vpop.f32.mrb[0].mxu0
  %396 = vmatprep.mubr.bf16.mxu0 %v227
  %397 = vmatmul.mubr.bf16.gmra.mrb[0].mxu0 %v226
  %v398 = vpop.f32.mrb[0].mxu0
  %v399 = vadd.f32 0.0, %v398
  %v400 = vpop.f32.mrb[0].mxu0
  %v401 = vpop.f32.mrb[0].mxu0
  %v402 = vadd.f32 0.0, %v401
  %v403 = vpop.f32.mrb[0].mxu0
  %404 = vdwg.mxu0
  %v405 = vadd.f32 %v220, %v391
  %v406 = vadd.f32 %v221, %v394
  %v407 = vadd.f32 %v222, %v399
  %v408 = vadd.f32 %v223, %v402
  %409 = vst [vmem:[#allocation2] sm:$0xff] %v405
  %410 = vst [vmem:[#allocation2 + $0x8] sm:$0xff] %v406
  %411 = vst [vmem:[#allocation2 + $0x10] sm:$0xff] %v407
  %412 = vst [vmem:[#allocation2 + $0x18] sm:$0xff] %v408
  // Predicated region
  $region34: #{transformer_encoder.11} parent=0 // pred_check
    %p413 = pneg %p27
  $region35: #{transformer_encoder.11} parent=0 // pred_check_branch
    %415 = sbr.rel (%p413) target = $region37
  $region36: #{transformer_encoder.11} parent=0 // pred_region
    %v416 = vld [vmem:[#allocation2] sm:$0xff]
    %v417 = vld [vmem:[#allocation2 + $0x8] sm:$0xff]
    %v418 = vld [vmem:[#allocation2 + $0x10] sm:$0xff]
    %v419 = vld [vmem:[#allocation2 + $0x18] sm:$0xff]
    %v420 = vld [vmem:[%s4] sm:$0x1]
    %v422 = vlaneseq
    %v423 = vshrl.u32 %v422, 7
    %v424 = vsub.s32 0, %v423
    %v425 = vrot.slane %v420, %v424
    %v427 = vadd.f32 %v416, %v425
    %v428 = vadd.f32 %v417, %v425
    %v429 = vadd.f32 %v418, %v425
    %v430 = vadd.f32 %v419, %v425
    %v431 = vld [vmem:[%s0] sm:$0xf]
    %v432 = vld [vmem:[%s0 + $0x4] sm:$0xf]
    %v433 = vld [vmem:[%s0 + $0x8] sm:$0xf]
    %v434 = vld [vmem:[%s0 + $0xc] sm:$0xf]
    %v435 = vunpack.c.l.bf16 %v431
    %v436 = vunpack.c.l.bf16 %v432
    %v437 = vunpack.c.l.bf16 %v433
    %v438 = vunpack.c.l.bf16 %v434
    %v439 = vadd.f32 %v427, %v435
    %v440 = vadd.f32 %v428, %v436
    %v441 = vadd.f32 %v429, %v437
    %v442 = vadd.f32 %v430, %v438
    %443 = vadd.xlane.f32.xlu0 %v439
    %v444 = vpop.xlane.xlu0 %443
    %445 = vadd.xlane.f32.xlu0 %v440
    %v446 = vpop.xlane.xlu0 %445
    %447 = vadd.xlane.f32.xlu0 %v441
    %v448 = vpop.xlane.xlu0 %447
    %449 = vadd.xlane.f32.xlu0 %v442
    %v450 = vpop.xlane.xlu0 %449
    %v451 = vrcp.pop 128.0
    %v452 = vmul.f32 %v444, %v451
    %v453 = vmul.f32 %v446, %v451
    %v454 = vmul.f32 %v448, %v451
    %v455 = vmul.f32 %v450, %v451
    %v456 = vsub.f32 %v439, %v452
    %v457 = vsub.f32 %v440, %v453
    %v458 = vsub.f32 %v441, %v454
    %v459 = vsub.f32 %v442, %v455
    %v460 = vmul.f32 %v456, %v456
    %v461 = vmul.f32 %v457, %v457
    %v462 = vmul.f32 %v458, %v458
    %v463 = vmul.f32 %v459, %v459
    %464 = vadd.xlane.f32.xlu0 %v460
    %v465 = vpop.xlane.xlu0 %464
    %466 = vadd.xlane.f32.xlu0 %v461
    %v467 = vpop.xlane.xlu0 %466
    %468 = vadd.xlane.f32.xlu0 %v462
    %v469 = vpop.xlane.xlu0 %468
    %470 = vadd.xlane.f32.xlu0 %v463
    %v471 = vpop.xlane.xlu0 %470
    %v472 = vmul.f32 %v465, %v451
    %v473 = vmul.f32 %v467, %v451
    %v474 = vmul.f32 %v469, %v451
    %v475 = vmul.f32 %v471, %v451
    %v476 = vadd.f32 %v472, 1e-05
    %v477 = vadd.f32 %v473, 1e-05
    %v478 = vadd.f32 %v474, 1e-05
    %v479 = vadd.f32 %v475, 1e-05
    %v480 = vrsqrt.pop %v476
    %v481 = vrsqrt.pop %v477
    %v482 = vrsqrt.pop %v478
    %v483 = vrsqrt.pop %v479
    %v484 = vmul.f32 %v456, %v480
    %v485 = vmul.f32 %v457, %v481
    %v486 = vmul.f32 %v458, %v482
    %v487 = vmul.f32 %v459, %v483
    %v488 = vld [vmem:[%s5] sm:$0x1]
    %v490 = vlaneseq
    %v491 = vshrl.u32 %v490, 7
    %v492 = vsub.s32 0, %v491
    %v493 = vrot.slane %v488, %v492
    %v495 = vmul.f32 %v484, %v493
    %v496 = vmul.f32 %v485, %v493
    %v497 = vmul.f32 %v486, %v493
    %v498 = vmul.f32 %v487, %v493
    %v499 = vld [vmem:[%s6] sm:$0x1]
    %v501 = vlaneseq
    %v502 = vshrl.u32 %v501, 7
    %v503 = vsub.s32 0, %v502
    %v504 = vrot.slane %v499, %v503
    %v506 = vadd.f32 %v495, %v504
    %v507 = vadd.f32 %v496, %v504
    %v508 = vadd.f32 %v497, %v504
    %v509 = vadd.f32 %v498, %v504
    %v510 = vpack.c.bf16 %v507, %v506
    %v511 = vpack.c.bf16 %v509, %v508
    %v514 = vunpack.c.l.b16 %v510
    %v515 = vunpack.c.h.b16 %v510
    %v516 = vunpack.c.l.b16 %v511
    %v517 = vunpack.c.h.b16 %v511
    %v518 = vpack.c.b16 %v514, %v514
    %v519 = vpack.c.b16 %v515, %v515
    %v520 = vpack.c.b16 %v516, %v516
    %v521 = vpack.c.b16 %v517, %v517
    %526 = vst [vmem:[%s7] sm:$0xf] %v518
    %527 = vst [vmem:[%s7 + $0x4] sm:$0xf] %v519
    %528 = vst [vmem:[%s7 + $0x8] sm:$0xf] %v520
    %529 = vst [vmem:[%s7 + $0xc] sm:$0xf] %v521
  $region37: #{transformer_encoder.11} parent=0 // pred_fallthru
    _
  // Predicated region
  $region38: #{transformer_encoder.11} parent=0 // pred_check
    _
  $region39: #{transformer_encoder.11} parent=0 // pred_check_branch
    %531 = sbr.rel (0) target = $region41
  $region40: #{transformer_encoder.11} parent=0 // pred_region
    _
  $region41: #{transformer_encoder.11} parent=0 // pred_fallthru
    _
  // Predicated region
  $region42: #{transformer_encoder.11} parent=0 // pred_check
    _
  $region43: #{transformer_encoder.11} parent=0 // pred_check_branch
    %533 = sbr.rel (0) target = $region45
  $region44: #{transformer_encoder.11} parent=0 // pred_region
    _
  $region45: #{transformer_encoder.11} parent=0 // pred_fallthru
    _

// kernel: transformer_encoder.12
$region0: #{transformer_encoder.12}
  #allocation0 [shape = 'u32[]', space=smem, size = 0x4, offset = 0x4, fixed_abs, tag = 'smem constant byte address 0x4 - core index']
  #allocation1 [shape = 'u32[144,128]{1,0:T(1,128)}', space=vmem, size = 0x12000, scoped, tag = 'internal scratch']
  %s0 = inlined_call_operand.vmem [shape: bf16[32,128], index: 0, kind: input, shape index: {}]
  %s1 = inlined_call_operand.vmem [shape: bf16[128,384], index: 1, kind: input, shape index: {}]
  %s2 = inlined_call_operand.vmem [shape: f32[1,384], index: 2, kind: input, shape index: {}]
  %s3 = inlined_call_operand.vmem [shape: bf16[32,384], index: 3, kind: output, shape index: {}]
  %s4 = sld [smem:[#allocation0]]
  $region22: #{transformer_encoder.12} parent=0
    _
  %s6 = ssub.s32 1, %s4
  %s7 = scalar_select 0, %s6, %s4
  // Predicated region
  $region2: #{transformer_encoder.12} parent=0 // pred_check
    _
  $region3: #{transformer_encoder.12} parent=0 // pred_check_branch
    %9 = sbr.rel (0) target = $region5
  $region4: #{transformer_encoder.12} parent=0 // pred_region
    _
  $region5: #{transformer_encoder.12} parent=0 // pred_fallthru
    _
  // Predicated region
  $region6: #{transformer_encoder.12} parent=0 // pred_check
    _
  $region7: #{transformer_encoder.12} parent=0 // pred_check_branch
    %11 = sbr.rel (0) target = $region9
  $region8: #{transformer_encoder.12} parent=0 // pred_region
    _
  $region9: #{transformer_encoder.12} parent=0 // pred_fallthru
    _
  // Predicated region
  $region10: #{transformer_encoder.12} parent=0 // pred_check
    _
  $region11: #{transformer_encoder.12} parent=0 // pred_check_branch
    %13 = sbr.rel (0) target = $region13
  $region12: #{transformer_encoder.12} parent=0 // pred_region
    _
  $region13: #{transformer_encoder.12} parent=0 // pred_fallthru
    _
  %v15 = vld [vmem:[%s0] sm:$0xf]
  %v16 = vld [vmem:[%s0 + $0x4] sm:$0xf]
  %v17 = vld [vmem:[%s0 + $0x8] sm:$0xf]
  %v18 = vld [vmem:[%s0 + $0xc] sm:$0xf]
  %v19 = vld [vmem:[%s1] sm:$0xff]
  %v20 = vld [vmem:[%s1 + $0x8] sm:$0xf]
  %v21 = vld [vmem:[%s1 + $0xc] sm:$0xff]
  %v22 = vld [vmem:[%s1 + $0x14] sm:$0xf]
  %v23 = vld [vmem:[%s1 + $0x18] sm:$0xff]
  %v24 = vld [vmem:[%s1 + $0x20] sm:$0xf]
  %v25 = vld [vmem:[%s1 + $0x24] sm:$0xff]
  %v26 = vld [vmem:[%s1 + $0x2c] sm:$0xf]
  %v27 = vld [vmem:[%s1 + $0x30] sm:$0xff]
  %v28 = vld [vmem:[%s1 + $0x38] sm:$0xf]
  %v29 = vld [vmem:[%s1 + $0x3c] sm:$0xff]
  %v30 = vld [vmem:[%s1 + $0x44] sm:$0xf]
  %v31 = vld [vmem:[%s1 + $0x48] sm:$0xff]
  %v32 = vld [vmem:[%s1 + $0x50] sm:$0xf]
  %v33 = vld [vmem:[%s1 + $0x54] sm:$0xff]
  %v34 = vld [vmem:[%s1 + $0x5c] sm:$0xf]
  %v35 = vld [vmem:[%s1 + $0x60] sm:$0xff]
  %v36 = vld [vmem:[%s1 + $0x68] sm:$0xf]
  %v37 = vld [vmem:[%s1 + $0x6c] sm:$0xff]
  %v38 = vld [vmem:[%s1 + $0x74] sm:$0xf]
  %v39 = vld [vmem:[%s1 + $0x78] sm:$0xff]
  %v40 = vld [vmem:[%s1 + $0x80] sm:$0xf]
  %v41 = vld [vmem:[%s1 + $0x84] sm:$0xff]
  %v42 = vld [vmem:[%s1 + $0x8c] sm:$0xf]
  %v43 = vld [vmem:[%s1 + $0x90] sm:$0xff]
  %v44 = vld [vmem:[%s1 + $0x98] sm:$0xf]
  %v45 = vld [vmem:[%s1 + $0x9c] sm:$0xff]
  %v46 = vld [vmem:[%s1 + $0xa4] sm:$0xf]
  %v47 = vld [vmem:[%s1 + $0xa8] sm:$0xff]
  %v48 = vld [vmem:[%s1 + $0xb0] sm:$0xf]
  %v49 = vld [vmem:[%s1 + $0xb4] sm:$0xff]
  %v50 = vld [vmem:[%s1 + $0xbc] sm:$0xf]
  %v51 = vld [vmem:[%s2] sm:$0x7]
  %v53 = vlaneseq
  %v54 = vshrl.u32 %v53, 7
  %v55 = vsub.s32 0, %v54
  %v56 = vrot.slane %v51, %v55
  %v57 = vlaneseq
  %v58 = vshrl.u32 %v57, 7
  %v59 = vsub.s32 1, %v58
  %v60 = vrot.slane %v51, %v59
  %v61 = vlaneseq
  %v62 = vshrl.u32 %v61, 7
  %v63 = vsub.s32 2, %v62
  %v64 = vrot.slane %v51, %v63
  %v72 = vunpack.c.l.b16 %v15
  %v73 = vunpack.c.l.b16 %v16
  %v74 = vunpack.c.l.b16 %v17
  %v75 = vunpack.c.l.b16 %v18
  %v76 = vpack.c.b16 %v73, %v72
  %v77 = vpack.c.b16 %v75, %v74
  %v112 = vunpack.c.l.b16 %v19
  %v113 = vunpack.c.h.b16 %v19
  %v114 = vunpack.c.l.b16 %v20
  %v115 = vunpack.c.l.b16 %v21
  %v116 = vunpack.c.h.b16 %v21
  %v117 = vunpack.c.l.b16 %v22
  %v118 = vunpack.c.l.b16 %v23
  %v119 = vunpack.c.h.b16 %v23
  %v120 = vunpack.c.l.b16 %v24
  %v121 = vunpack.c.l.b16 %v25
  %v122 = vunpack.c.h.b16 %v25
  %v123 = vunpack.c.l.b16 %v26
  %v124 = vunpack.c.l.b16 %v27
  %v125 = vunpack.c.h.b16 %v27
  %v126 = vunpack.c.l.b16 %v28
  %v127 = vunpack.c.l.b16 %v29
  %v128 = vunpack.c.h.b16 %v29
  %v129 = vunpack.c.l.b16 %v30
  %v130 = vunpack.c.l.b16 %v31
  %v131 = vunpack.c.h.b16 %v31
  %v132 = vunpack.c.l.b16 %v32
  %v133 = vunpack.c.l.b16 %v33
  %v134 = vunpack.c.h.b16 %v33
  %v135 = vunpack.c.l.b16 %v34
  %v136 = vunpack.c.l.b16 %v35
  %v137 = vunpack.c.h.b16 %v35
  %v138 = vunpack.c.l.b16 %v36
  %v139 = vunpack.c.l.b16 %v37
  %v140 = vunpack.c.h.b16 %v37
  %v141 = vunpack.c.l.b16 %v38
  %v142 = vunpack.c.l.b16 %v39
  %v143 = vunpack.c.h.b16 %v39
  %v144 = vunpack.c.l.b16 %v40
  %v145 = vunpack.c.l.b16 %v41
  %v146 = vunpack.c.h.b16 %v41
  %v147 = vunpack.c.l.b16 %v42
  %v148 = vunpack.c.l.b16 %v43
  %v149 = vunpack.c.h.b16 %v43
  %v150 = vunpack.c.l.b16 %v44
  %v151 = vunpack.c.l.b16 %v45
  %v152 = vunpack.c.h.b16 %v45
  %v153 = vunpack.c.l.b16 %v46
  %v154 = vunpack.c.l.b16 %v47
  %v155 = vunpack.c.h.b16 %v47
  %v156 = vunpack.c.l.b16 %v48
  %v157 = vunpack.c.l.b16 %v49
  %v158 = vunpack.c.h.b16 %v49
  %v159 = vunpack.c.l.b16 %v50
  %v160 = vpack.c.b16 %v115, %v112
  %v161 = vpack.c.b16 %v116, %v113
  %v162 = vpack.c.b16 %v117, %v114
  %v163 = vpack.c.b16 %v121, %v118
  %v164 = vpack.c.b16 %v122, %v119
  %v165 = vpack.c.b16 %v123, %v120
  %v166 = vpack.c.b16 %v127, %v124
  %v167 = vpack.c.b16 %v128, %v125
  %v168 = vpack.c.b16 %v129, %v126
  %v169 = vpack.c.b16 %v133, %v130
  %v170 = vpack.c.b16 %v134, %v131
  %v171 = vpack.c.b16 %v135, %v132
  %v172 = vpack.c.b16 %v139, %v136
  %v173 = vpack.c.b16 %v140, %v137
  %v174 = vpack.c.b16 %v141, %v138
  %v175 = vpack.c.b16 %v145, %v142
  %v176 = vpack.c.b16 %v146, %v143
  %v177 = vpack.c.b16 %v147, %v144
  %v178 = vpack.c.b16 %v151, %v148
  %v179 = vpack.c.b16 %v152, %v149
  %v180 = vpack.c.b16 %v153, %v150
  %v181 = vpack.c.b16 %v157, %v154
  %v182 = vpack.c.b16 %v158, %v155
  %v183 = vpack.c.b16 %v159, %v156
  %208 = vmatprep.subr.bf16.mxu0 %v161
  %209 = vmatpush1.bf16.msra.mxu0 %v160
  %210 = vmatprep.subr.bf16.mxu0 %v164
  %211 = vmatpush1.bf16.msra.mxu0 %v163
  %212 = vmatprep.subr.bf16.mxu0 %v167
  %213 = vmatpush1.bf16.msra.mxu0 %v166
  %214 = vmatprep.subr.bf16.mxu0 %v170
  %215 = vmatpush1.bf16.msra.mxu0 %v169
  %216 = vmatprep.subr.bf16.mxu0 %v173
  %217 = vmatpush1.bf16.msra.mxu0 %v172
  %218 = vmatprep.subr.bf16.mxu0 %v176
  %219 = vmatpush1.bf16.msra.mxu0 %v175
  %220 = vmatprep.subr.bf16.mxu0 %v179
  %221 = vmatpush1.bf16.msra.mxu0 %v178
  %222 = vmatprep.subr.bf16.mxu0 %v182
  %223 = vmatpush1.bf16.msra.mxu0 %v181
  %224 = vmatprep.subr.bf16.mxu0 0
  %225 = vmatpush1.bf16.msra.mxu0 0
  %226 = vmatprep.subr.bf16.mxu0 0
  %227 = vmatpush1.bf16.msra.mxu0 0
  %228 = vmatprep.subr.bf16.mxu0 0
  %229 = vmatpush1.bf16.msra.mxu0 0
  %230 = vmatprep.subr.bf16.mxu0 0
  %231 = vmatpush1.bf16.msra.mxu0 0
  %232 = vmatprep.subr.bf16.mxu0 0
  %233 = vmatpush1.bf16.msra.mxu0 0
  %234 = vmatprep.subr.bf16.mxu0 0
  %235 = vmatpush1.bf16.msra.mxu0 0
  %236 = vmatprep.subr.bf16.mxu0 0
  %237 = vmatpush1.bf16.msra.mxu0 0
  %238 = vmatprep.subr.bf16.mxu0 0
  %239 = vmatpush1.bf16.msra.mxu0 0
  %240 = vmatprep.mubr.bf16.mxu0 0
  %241 = vmatmul.mubr.bf16.gmra.mrb[0].mxu0 %v76
  %v242 = vpop.f32.mrb[0].mxu0
  %v243 = vadd.f32 %v56, %v242
  %v244 = vpop.f32.mrb[0].mxu0
  %v245 = vadd.f32 %v60, %v244
  %v246 = vpop.f32.mrb[0].mxu0
  %v247 = vadd.f32 %v56, %v246
  %v248 = vpop.f32.mrb[0].mxu0
  %v249 = vadd.f32 %v60, %v248
  %250 = vmatprep.mubr.bf16.mxu0 0
  %251 = vmatmul.mubr.bf16.gmra.mrb[0].mxu0 %v77
  %v252 = vpop.f32.mrb[0].mxu0
  %v253 = vadd.f32 %v56, %v252
  %v254 = vpop.f32.mrb[0].mxu0
  %v255 = vadd.f32 %v60, %v254
  %v256 = vpop.f32.mrb[0].mxu0
  %v257 = vadd.f32 %v56, %v256
  %v258 = vpop.f32.mrb[0].mxu0
  %v259 = vadd.f32 %v60, %v258
  %260 = vdwg.mxu0
  %261 = vmatprep.subr.bf16.mxu0 0
  %262 = vmatpush1.bf16.msra.mxu0 %v162
  %263 = vmatprep.subr.bf16.mxu0 0
  %264 = vmatpush1.bf16.msra.mxu0 %v165
  %265 = vmatprep.subr.bf16.mxu0 0
  %266 = vmatpush1.bf16.msra.mxu0 %v168
  %267 = vmatprep.subr.bf16.mxu0 0
  %268 = vmatpush1.bf16.msra.mxu0 %v171
  %269 = vmatprep.subr.bf16.mxu0 0
  %270 = vmatpush1.bf16.msra.mxu0 %v174
  %271 = vmatprep.subr.bf16.mxu0 0
  %272 = vmatpush1.bf16.msra.mxu0 %v177
  %273 = vmatprep.subr.bf16.mxu0 0
  %274 = vmatpush1.bf16.msra.mxu0 %v180
  %275 = vmatprep.subr.bf16.mxu0 0
  %276 = vmatpush1.bf16.msra.mxu0 %v183
  %277 = vmatprep.subr.bf16.mxu0 0
  %278 = vmatpush1.bf16.msra.mxu0 0
  %279 = vmatprep.subr.bf16.mxu0 0
  %280 = vmatpush1.bf16.msra.mxu0 0
  %281 = vmatprep.subr.bf16.mxu0 0
  %282 = vmatpush1.bf16.msra.mxu0 0
  %283 = vmatprep.subr.bf16.mxu0 0
  %284 = vmatpush1.bf16.msra.mxu0 0
  %285 = vmatprep.subr.bf16.mxu0 0
  %286 = vmatpush1.bf16.msra.mxu0 0
  %287 = vmatprep.subr.bf16.mxu0 0
  %288 = vmatpush1.bf16.msra.mxu0 0
  %289 = vmatprep.subr.bf16.mxu0 0
  %290 = vmatpush1.bf16.msra.mxu0 0
  %291 = vmatprep.subr.bf16.mxu0 0
  %292 = vmatpush1.bf16.msra.mxu0 0
  %293 = vmatprep.mubr.bf16.mxu0 0
  %294 = vmatmul.mubr.bf16.gmra.mrb[0].mxu0 %v76
  %v295 = vpop.f32.mrb[0].mxu0
  %v296 = vadd.f32 %v64, %v295
  %v297 = vpop.f32.mrb[0].mxu0
  %v298 = vpop.f32.mrb[0].mxu0
  %v299 = vadd.f32 %v64, %v298
  %v300 = vpop.f32.mrb[0].mxu0
  %301 = vmatprep.mubr.bf16.mxu0 0
  %302 = vmatmul.mubr.bf16.gmra.mrb[0].mxu0 %v77
  %v303 = vpop.f32.mrb[0].mxu0
  %v304 = vadd.f32 %v64, %v303
  %v305 = vpop.f32.mrb[0].mxu0
  %v306 = vpop.f32.mrb[0].mxu0
  %v307 = vadd.f32 %v64, %v306
  %v308 = vpop.f32.mrb[0].mxu0
  %309 = vdwg.mxu0
  %v310 = vpack.c.bf16 %v247, %v243
  %v311 = vpack.c.bf16 %v249, %v245
  %v312 = vpack.c.bf16 %v299, %v296
  %v313 = vpack.c.bf16 %v257, %v253
  %v314 = vpack.c.bf16 %v259, %v255
  %v315 = vpack.c.bf16 %v307, %v304
  %v322 = vunpack.c.l.b16 %v310
  %v323 = vunpack.c.l.b16 %v311
  %v324 = vunpack.c.l.b16 %v312
  %v325 = vunpack.c.h.b16 %v310
  %v326 = vunpack.c.h.b16 %v311
  %v327 = vunpack.c.h.b16 %v312
  %v328 = vunpack.c.l.b16 %v313
  %v329 = vunpack.c.l.b16 %v314
  %v330 = vunpack.c.l.b16 %v315
  %v331 = vunpack.c.h.b16 %v313
  %v332 = vunpack.c.h.b16 %v314
  %v333 = vunpack.c.h.b16 %v315
  %v334 = vpack.c.b16 %v323, %v322
  %v335 = vpack.c.b16 %v324, %v324
  %v336 = vpack.c.b16 %v326, %v325
  %v337 = vpack.c.b16 %v327, %v327
  %v338 = vpack.c.b16 %v329, %v328
  %v339 = vpack.c.b16 %v330, %v330
  %v340 = vpack.c.b16 %v332, %v331
  %v341 = vpack.c.b16 %v333, %v333
  %350 = vst [vmem:[%s3] sm:$0xff] %v334
  %351 = vst [vmem:[%s3 + $0x8] sm:$0xf] %v335
  %352 = vst [vmem:[%s3 + $0xc] sm:$0xff] %v336
  %353 = vst [vmem:[%s3 + $0x14] sm:$0xf] %v337
  %354 = vst [vmem:[%s3 + $0x18] sm:$0xff] %v338
  %355 = vst [vmem:[%s3 + $0x20] sm:$0xf] %v339
  %356 = vst [vmem:[%s3 + $0x24] sm:$0xff] %v340
  %357 = vst [vmem:[%s3 + $0x2c] sm:$0xf] %v341
  // Predicated region
  $region14: #{transformer_encoder.12} parent=0 // pred_check
    _
  $region15: #{transformer_encoder.12} parent=0 // pred_check_branch
    %359 = sbr.rel (0) target = $region17
  $region16: #{transformer_encoder.12} parent=0 // pred_region
    _
  $region17: #{transformer_encoder.12} parent=0 // pred_fallthru
    _
  // Predicated region
  $region18: #{transformer_encoder.12} parent=0 // pred_check
    _
  $region19: #{transformer_encoder.12} parent=0 // pred_check_branch
    %361 = sbr.rel (0) target = $region21
  $region20: #{transformer_encoder.12} parent=0 // pred_region
    _
  $region21: #{transformer_encoder.12} parent=0 // pred_fallthru
    _

</llo_original>
